<compile_context>
chip_gen: v7x
topology: tpu7x:2x2x1
jax: 0.10.0
libtpu: 0.0.40
codegen_flags: <defaults>
</compile_context>

<pallas_src>
import functools

import numpy as np
import jax
import jax.numpy as jnp
from jax import lax
from jax.experimental import pallas as pl
from jax.experimental.pallas import tpu as pltpu

LANE = 128


def _pad_to_lane(n):
    return ((n + LANE - 1) // LANE) * LANE


def _pick_tile(m, pref=512):
    for t in (pref, 256, 128, 64, 32, 16, 8):
        if m % t == 0:
            return t
    return m


def _gelu(x):
    # TODO(synk): PyTorch nn.GELU() default is the exact erf formulation; the
    # tanh approximation is used because erf has no guaranteed Mosaic lowering.
    c = jnp.float32(0.7978845608028654)  # sqrt(2/pi)
    return 0.5 * x * (1.0 + jnp.tanh(c * (x + 0.044715 * x * x * x)))


# ----------------------------------------------------------------------------
# Kernel 1: stem conv (as matmul on im2col patches) + bias + GELU + BN2d
#   out = gelu(patches @ W + b) * s + t
# ----------------------------------------------------------------------------
def _stem_kernel(p_ref, w_ref, b_ref, s_ref, t_ref, o_ref):
    acc = jnp.dot(p_ref[...].astype(jnp.bfloat16), w_ref[...],
                  preferred_element_type=jnp.float32)
    y = _gelu(acc + b_ref[...])
    o_ref[...] = y * s_ref[...] + t_ref[...]


def stem_gelu_bn(patches, w_bf16, b, s, t, *, tm=512):
    M, K = patches.shape
    _, N = w_bf16.shape
    tm = _pick_tile(M, tm)
    return pl.pallas_call(
        _stem_kernel,
        out_shape=jax.ShapeDtypeStruct((M, N), jnp.float32),
        grid=(M // tm,),
        in_specs=[
            pl.BlockSpec((tm, K), lambda i: (i, 0)),
            pl.BlockSpec((K, N), lambda i: (0, 0)),
            pl.BlockSpec((1, N), lambda i: (0, 0)),
            pl.BlockSpec((1, N), lambda i: (0, 0)),
            pl.BlockSpec((1, N), lambda i: (0, 0)),
        ],
        out_specs=pl.BlockSpec((tm, N), lambda i: (i, 0)),
        compiler_params=pltpu.CompilerParams(
            dimension_semantics=("parallel",)),
    )(patches, w_bf16, b, s, t)


# ----------------------------------------------------------------------------
# Kernel 2: segmenter head tail — depthwise 3x3 (padding=1, stride=1, no bias)
#           + pointwise 1x1 + masked channel softmax + adaptive 4x4 avg pool.
# Grid iterates over batch images; per-program live state is one image.
# Outputs: seg logits (for return_seg) and pooled classifier features.
# ----------------------------------------------------------------------------
def _seghead_kernel(x_ref, dw_ref, pw_ref, pool_ref, logit_ref, pooled_ref,
                    *, seg_classes):
    _, Hpad, Wpad, C = x_ref.shape
    Ho, Wo = Hpad - 2, Wpad - 2
    acc = jnp.zeros((1, Ho, Wo, C), jnp.float32)
    for k in range(9):
        ki, kj = divmod(k, 3)
        acc = acc + x_ref[:, ki:ki + Ho, kj:kj + Wo, :] * dw_ref[k:k + 1, :]
    # Pointwise 1x1 conv as a matmul (bf16 MXU inputs, f32 accumulation).
    logits = jnp.dot(acc.reshape(Ho * Wo, C).astype(jnp.bfloat16), pw_ref[...],
                     preferred_element_type=jnp.float32)
    logit_ref[...] = logits
    # Softmax over the first `seg_classes` lanes only (rest are lane padding,
    # whose exp underflows to exactly 0, so padded lanes stay exactly 0).
    col = lax.broadcasted_iota(jnp.int32, logits.shape, 1)
    lm = jnp.where(col < seg_classes, logits, jnp.float32(-1e30))
    m = jnp.max(lm, axis=-1, keepdims=True)
    e = jnp.exp(lm - m)
    masks = e * pl.reciprocal(jnp.sum(e, axis=-1, keepdims=True), approx=True)
    # AdaptiveAvgPool2d((4,4)) as a constant (16, Ho*Wo) matmul on the MXU —
    # no strided relayouts, and the dense masks never leave VMEM.
    pooled_ref[...] = jnp.dot(pool_ref[...], masks,
                              preferred_element_type=jnp.float32)


def seghead(feat_nhwc, dw_w, pw_w_bf16, pool_mat, *, seg_classes):
    B, Ho, Wo, C = feat_nhwc.shape
    Sp = pw_w_bf16.shape[1]
    P = pool_mat.shape[0]  # 16 pooled positions
    xp = jnp.pad(feat_nhwc, ((0, 0), (1, 1), (1, 1), (0, 0)))
    kernel = functools.partial(_seghead_kernel, seg_classes=seg_classes)
    return pl.pallas_call(
        kernel,
        out_shape=(jax.ShapeDtypeStruct((B * Ho * Wo, Sp), jnp.float32),
                   jax.ShapeDtypeStruct((B * P, Sp), jnp.float32)),
        grid=(B,),
        in_specs=[
            pl.BlockSpec((1, Ho + 2, Wo + 2, C), lambda b: (b, 0, 0, 0)),
            pl.BlockSpec((9, C), lambda b: (0, 0)),
            pl.BlockSpec((C, Sp), lambda b: (0, 0)),
            pl.BlockSpec((P, Ho * Wo), lambda b: (0, 0)),
        ],
        out_specs=(pl.BlockSpec((Ho * Wo, Sp), lambda b: (b, 0)),
                   pl.BlockSpec((P, Sp), lambda b: (b, 0))),
        compiler_params=pltpu.CompilerParams(
            dimension_semantics=("parallel",)),
    )(xp, dw_w, pw_w_bf16, pool_mat)


# ----------------------------------------------------------------------------
# Kernel 3: fused classifier chain (BNs already folded into weights/biases):
#   h1 = gelu(x @ w1 + b1); h2 = gelu(h1 @ w2 + b2); out = h2 @ w3 + b3
# All intermediates stay on-chip; all matmul operands/outputs are 128-lane.
# ----------------------------------------------------------------------------
def _classifier_kernel(x_ref, w1_ref, b1_ref, w2_ref, b2_ref, w3_ref, b3_ref,
                       o_ref):
    x = x_ref[...].astype(jnp.bfloat16)
    h1 = _gelu(jnp.dot(x, w1_ref[...],
                       preferred_element_type=jnp.float32) + b1_ref[...])
    h2 = _gelu(jnp.dot(h1.astype(jnp.bfloat16), w2_ref[...],
                       preferred_element_type=jnp.float32) + b2_ref[...])
    o_ref[...] = jnp.dot(h2.astype(jnp.bfloat16), w3_ref[...],
                         preferred_element_type=jnp.float32) + b3_ref[...]


def classifier_chain(x, w1, b1, w2, b2, w3, b3):
    B, K = x.shape
    H1 = w1.shape[1]
    H2 = w2.shape[1]
    N = w3.shape[1]
    return pl.pallas_call(
        _classifier_kernel,
        out_shape=jax.ShapeDtypeStruct((B, N), jnp.float32),
        grid=(1,),
        in_specs=[
            pl.BlockSpec((B, K), lambda i: (0, 0)),
            pl.BlockSpec((K, H1), lambda i: (0, 0)),
            pl.BlockSpec((1, H1), lambda i: (0, 0)),
            pl.BlockSpec((H1, H2), lambda i: (0, 0)),
            pl.BlockSpec((1, H2), lambda i: (0, 0)),
            pl.BlockSpec((H2, N), lambda i: (0, 0)),
            pl.BlockSpec((1, N), lambda i: (0, 0)),
        ],
        out_specs=pl.BlockSpec((B, N), lambda i: (0, 0)),
        compiler_params=pltpu.CompilerParams(
            dimension_semantics=("arbitrary",)),
    )(x, w1, b1, w2, b2, w3, b3)


# ----------------------------------------------------------------------------
# Parameters: logical (PyTorch-like) init, then padded/folded kernel params.
# ----------------------------------------------------------------------------
def init_params(key, *, cin, num_features, seg_classes, num_classes):
    ks = jax.random.split(key, 8)
    eps = 1e-5
    bn_s = 1.0 / jnp.sqrt(1.0 + eps)  # eval-mode BN, default running stats
    hidden = num_features // 4
    p = {}
    # synthetic segmenter.forward_features: 3x3 / stride-2 conv, cin -> F
    p["stem_w"] = 0.1 * jax.random.normal(ks[0], (9 * cin, num_features), jnp.float32)
    p["stem_b"] = 0.1 * jax.random.normal(ks[1], (num_features,), jnp.float32)
    # segmenter_head: GELU -> BN2d(F) -> SeparableConv2d(F, seg_classes, k=3)
    p["head_bn_scale"] = jnp.full((num_features,), bn_s, jnp.float32)
    p["head_bn_shift"] = jnp.zeros((num_features,), jnp.float32)
    p["dw_w"] = 0.1 * jax.random.normal(ks[2], (9, num_features), jnp.float32)
    p["pw_w"] = 0.1 * jax.random.normal(ks[3], (num_features, seg_classes), jnp.float32)
    # classifier
    p["cls_conv_w"] = 0.1 * jax.random.normal(ks[4], (16 * seg_classes, hidden), jnp.float32)
    p["cls_conv_b"] = 0.1 * jax.random.normal(ks[5], (hidden,), jnp.float32)
    p["cls_bn_scale"] = jnp.full((hidden,), bn_s, jnp.float32)
    p["cls_bn_shift"] = jnp.zeros((hidden,), jnp.float32)
    p["fc1_w"] = 0.1 * jax.random.normal(ks[6], (hidden, num_features), jnp.float32)
    p["fc1_b"] = jnp.zeros((num_features,), jnp.float32)
    p["bn1d_scale"] = jnp.full((num_features,), bn_s, jnp.float32)
    p["bn1d_shift"] = jnp.zeros((num_features,), jnp.float32)
    p["fc2_w"] = 0.1 * jax.random.normal(ks[7], (num_features, num_classes), jnp.float32)
    p["fc2_b"] = jnp.zeros((num_classes,), jnp.float32)
    return p


def _pad2(a, rows, cols):
    r, c = a.shape
    return jnp.pad(a, ((0, rows - r), (0, cols - c)))


def _pad_row(v, cols, fill=0.0):
    v = v.reshape(1, -1)
    return jnp.pad(v, ((0, 0), (0, cols - v.shape[1])), constant_values=fill)


def prepare_kernel_params(p, *, num_features, seg_classes, num_classes):
    """Pad channel dims to 128 lanes, fold BNs, cast matmul weights to bf16."""
    hidden = num_features // 4
    Fp = _pad_to_lane(num_features)
    Sp = _pad_to_lane(seg_classes)
    Hp = _pad_to_lane(hidden)
    Cp = _pad_to_lane(num_classes)
    kp = {}
    # stem: gelu(x@W + b) * s + t   (BN2d sits after GELU -> kept as epilogue)
    kp["stem_w"] = _pad2(p["stem_w"], p["stem_w"].shape[0], Fp).astype(jnp.bfloat16)
    kp["stem_b"] = _pad_row(p["stem_b"], Fp).astype(jnp.float32)
    kp["stem_s"] = _pad_row(p["head_bn_scale"], Fp, fill=1.0).astype(jnp.float32)
    kp["stem_t"] = _pad_row(p["head_bn_shift"], Fp).astype(jnp.float32)
    # separable conv (padded channels/classes are exactly zero end-to-end)
    kp["dw_w"] = _pad2(p["dw_w"], 9, Fp).astype(jnp.float32)
    kp["pw_w"] = _pad2(p["pw_w"], Fp, Sp).astype(jnp.bfloat16)
    # classifier: BN precedes GELU -> fold BN into weights / biases
    w1 = p["cls_conv_w"] * p["cls_bn_scale"][None, :]
    b1 = p["cls_conv_b"] * p["cls_bn_scale"] + p["cls_bn_shift"]
    kp["cls_w1"] = _pad2(w1, w1.shape[0], Hp).astype(jnp.bfloat16)
    kp["cls_b1"] = _pad_row(b1, Hp).astype(jnp.float32)
    w2 = p["fc1_w"] * p["bn1d_scale"][None, :]
    b2 = p["fc1_b"] * p["bn1d_scale"] + p["bn1d_shift"]
    kp["cls_w2"] = _pad2(w2, Hp, Fp).astype(jnp.bfloat16)
    kp["cls_b2"] = _pad_row(b2, Fp).astype(jnp.float32)
    kp["cls_w3"] = _pad2(p["fc2_w"], Fp, Cp).astype(jnp.bfloat16)
    kp["cls_b3"] = _pad_row(p["fc2_b"], Cp).astype(jnp.float32)
    return kp


def _adaptive_pool_matrix(Ho, Wo, ph=4, pw=4):
    """Constant matrix implementing AdaptiveAvgPool2d((4,4)) as a matmul."""
    assert Ho % ph == 0 and Wo % pw == 0, "adaptive pool assumes divisible sizes"
    sh, sw = Ho // ph, Wo // pw
    P = np.zeros((ph * pw, Ho * Wo), np.float32)
    for h in range(Ho):
        for w in range(Wo):
            P[(h // sh) * pw + (w // sw), h * Wo + w] = 1.0 / (sh * sw)
    return jnp.asarray(P)


# ----------------------------------------------------------------------------
# Forward pass (Pallas kernels + thin XLA glue)
# ----------------------------------------------------------------------------
def twostage_part_model(kparams, x_nchw, *, seg_classes, num_classes,
                        return_seg=False):
    B, Cin, H, W = x_nchw.shape
    x = jnp.transpose(x_nchw, (0, 2, 3, 1)).astype(jnp.float32)  # NHWC

    # segmenter.forward_features: one fused XLA im2col + fused Pallas matmul.
    patches = lax.conv_general_dilated_patches(
        x, filter_shape=(3, 3), window_strides=(2, 2),
        padding=((1, 1), (1, 1)),
        dimension_numbers=("NHWC", "HWIO", "NHWC"))
    _, Ho, Wo, K = patches.shape
    patches = patches.reshape(B * Ho * Wo, K)

    feat = stem_gelu_bn(patches, kparams["stem_w"], kparams["stem_b"],
                        kparams["stem_s"], kparams["stem_t"])       # (M, Fp)
    Fp = feat.shape[1]
    feat_nhwc = feat.reshape(B, Ho, Wo, Fp)

    # SeparableConv2d + softmax feature extractor + adaptive 4x4 avg pool,
    # all fused in one kernel; only logits + pooled features hit HBM.
    pool_mat = _adaptive_pool_matrix(Ho, Wo, 4, 4)
    logits, pooled = seghead(feat_nhwc, kparams["dw_w"], kparams["pw_w"],
                             pool_mat, seg_classes=seg_classes)
    Sp = pooled.shape[1]

    # classifier input: (B, 4, 4, seg_classes) flattened in (h, w, c) order.
    flat = pooled.reshape(B, 16, Sp)[..., :seg_classes].reshape(
        B, 16 * seg_classes)

    cls = classifier_chain(flat, kparams["cls_w1"], kparams["cls_b1"],
                           kparams["cls_w2"], kparams["cls_b2"],
                           kparams["cls_w3"], kparams["cls_b3"])
    cls_result = cls[:, :num_classes]

    if return_seg:
        seg = logits.reshape(B, Ho, Wo, -1)[..., :seg_classes]
        seg_nchw = jnp.transpose(seg, (0, 3, 1, 2))
        return cls_result, [seg_nchw]
    return cls_result


# ----------------------------------------------------------------------------
if __name__ == "__main__":
    B, CIN, H, W = 2, 4, 16, 16
    NUM_FEATURES, SEG_CLASSES, NUM_CLASSES = 32, 8, 10

    key = jax.random.PRNGKey(0)
    k_param, k_in = jax.random.split(key)
    params = init_params(k_param, cin=CIN, num_features=NUM_FEATURES,
                         seg_classes=SEG_CLASSES, num_classes=NUM_CLASSES)
    kparams = prepare_kernel_params(params, num_features=NUM_FEATURES,
                                    seg_classes=SEG_CLASSES,
                                    num_classes=NUM_CLASSES)
    x = jax.random.normal(k_in, (B, CIN, H, W), jnp.float32)

    fwd = jax.jit(functools.partial(twostage_part_model,
                                    seg_classes=SEG_CLASSES,
                                    num_classes=NUM_CLASSES))
    out = jax.block_until_ready(fwd(kparams, x))
    assert out.shape == (B, NUM_CLASSES)
    assert bool(jnp.all(jnp.isfinite(out)))

    # exercise the return_seg path as well
    cls2, segs = twostage_part_model(kparams, x, seg_classes=SEG_CLASSES,
                                     num_classes=NUM_CLASSES, return_seg=True)
    cls2 = jax.block_until_ready(cls2)
    assert segs[0].shape == (B, SEG_CLASSES, H // 2, W // 2)
    assert bool(jnp.all(jnp.isfinite(segs[0])))
    assert bool(jnp.all(jnp.isfinite(cls2)))

    print("KERNEL_OK")
</pallas_src>

<mosaic_0001>
module attributes {stable_mosaic.version = 11 : i64} {
  func.func @_stem_kernel(%arg0: i32, %arg1: memref<128x36xf32, #tpu.memory_space<vmem>>, %arg2: memref<36x128xbf16, #tpu.memory_space<vmem>>, %arg3: memref<1x128xf32, #tpu.memory_space<vmem>>, %arg4: memref<1x128xf32, #tpu.memory_space<vmem>>, %arg5: memref<1x128xf32, #tpu.memory_space<vmem>>, %arg6: memref<128x128xf32, #tpu.memory_space<vmem>>) attributes {dimension_semantics = [#tpu.dimension_semantics<parallel>], iteration_bounds = array<i64: 1>, scalar_prefetch = 0 : i64, scratch_operands = 0 : i64, tpu.core_type = #tpu.core_type<tc>, window_params = [{transform_indices = @transform_0, window_bounds = array<i64: 128, 36>}, {pipeline_mode = #tpu.pipeline_mode<synchronous>, transform_indices = @transform_1, window_bounds = array<i64: 36, 128>}, {pipeline_mode = #tpu.pipeline_mode<synchronous>, transform_indices = @transform_2, window_bounds = array<i64: 1, 128>}, {pipeline_mode = #tpu.pipeline_mode<synchronous>, transform_indices = @transform_3, window_bounds = array<i64: 1, 128>}, {pipeline_mode = #tpu.pipeline_mode<synchronous>, transform_indices = @transform_4, window_bounds = array<i64: 1, 128>}, {transform_indices = @transform_5, window_bounds = array<i64: 128, 128>}]} {
    %c0 = arith.constant 0 : index
    %c0_0 = arith.constant 0 : index
    %0 = vector.load %arg1[%c0, %c0_0] : memref<128x36xf32, #tpu.memory_space<vmem>>, vector<128x36xf32>
    %1 = arith.truncf %0 : vector<128x36xf32> to vector<128x36xbf16>
    %c0_1 = arith.constant 0 : index
    %c0_2 = arith.constant 0 : index
    %2 = vector.load %arg2[%c0_1, %c0_2] : memref<36x128xbf16, #tpu.memory_space<vmem>>, vector<36x128xbf16>
    %cst = arith.constant dense<0.000000e+00> : vector<128x128xf32>
    %3 = tpu.matmul %1, %2, %cst {dimension_numbers = #tpu.dot_dimension_numbers<[1], [0], [0], [1], [0, 0, 1, 1], [], []>} : vector<128x36xbf16>, vector<36x128xbf16>, vector<128x128xf32> -> vector<128x128xf32>
    %c0_3 = arith.constant 0 : index
    %c0_4 = arith.constant 0 : index
    %4 = vector.load %arg3[%c0_3, %c0_4] : memref<1x128xf32, #tpu.memory_space<vmem>>, vector<1x128xf32>
    %5 = vector.broadcast %4 : vector<1x128xf32> to vector<128x128xf32>
    %6 = arith.addf %3, %5 : vector<128x128xf32>
    %cst_5 = arith.constant 5.000000e-01 : f32
    %7 = vector.broadcast %cst_5 : f32 to vector<128x128xf32>
    %8 = arith.mulf %7, %6 : vector<128x128xf32>
    %cst_6 = arith.constant 4.471500e-02 : f32
    %9 = vector.broadcast %cst_6 : f32 to vector<128x128xf32>
    %10 = arith.mulf %9, %6 : vector<128x128xf32>
    %11 = arith.mulf %10, %6 : vector<128x128xf32>
    %12 = arith.mulf %11, %6 : vector<128x128xf32>
    %13 = arith.addf %6, %12 : vector<128x128xf32>
    %cst_7 = arith.constant 0.797884583 : f32
    %14 = vector.broadcast %cst_7 : f32 to vector<128x128xf32>
    %15 = arith.mulf %14, %13 : vector<128x128xf32>
    %16 = math.tanh %15 : vector<128x128xf32>
    %cst_8 = arith.constant 1.000000e+00 : f32
    %17 = vector.broadcast %cst_8 : f32 to vector<128x128xf32>
    %18 = arith.addf %17, %16 : vector<128x128xf32>
    %19 = arith.mulf %8, %18 : vector<128x128xf32>
    %c0_9 = arith.constant 0 : index
    %c0_10 = arith.constant 0 : index
    %20 = vector.load %arg4[%c0_9, %c0_10] : memref<1x128xf32, #tpu.memory_space<vmem>>, vector<1x128xf32>
    %21 = vector.broadcast %20 : vector<1x128xf32> to vector<128x128xf32>
    %22 = arith.mulf %19, %21 : vector<128x128xf32>
    %c0_11 = arith.constant 0 : index
    %c0_12 = arith.constant 0 : index
    %23 = vector.load %arg5[%c0_11, %c0_12] : memref<1x128xf32, #tpu.memory_space<vmem>>, vector<1x128xf32>
    %24 = vector.broadcast %23 : vector<1x128xf32> to vector<128x128xf32>
    %25 = arith.addf %22, %24 : vector<128x128xf32>
    %c0_13 = arith.constant 0 : index
    %c0_14 = arith.constant 0 : index
    %26 = vector.load %arg6[%c0_13, %c0_14] : memref<128x128xf32, #tpu.memory_space<vmem>>, vector<128x128xf32>
    tpu.vector_store %arg6[%c0_13, %c0_14], %25 {strides = array<i32>} : memref<128x128xf32, #tpu.memory_space<vmem>>, vector<128x128xf32>,
    return
  }
  func.func @transform_0(%arg0: i32) -> (i32, i32) {
    %c0_i32 = arith.constant 0 : i32
    %c0_i32_0 = arith.constant 0 : i32
    return %arg0, %c0_i32 : i32, i32
  }
  func.func @transform_1(%arg0: i32) -> (i32, i32) {
    %c0_i32 = arith.constant 0 : i32
    %c0_i32_0 = arith.constant 0 : i32
    %c0_i32_1 = arith.constant 0 : i32
    return %c0_i32, %c0_i32_0 : i32, i32
  }
  func.func @transform_2(%arg0: i32) -> (i32, i32) {
    %c0_i32 = arith.constant 0 : i32
    %c0_i32_0 = arith.constant 0 : i32
    %c0_i32_1 = arith.constant 0 : i32
    return %c0_i32, %c0_i32_0 : i32, i32
  }
  func.func @transform_3(%arg0: i32) -> (i32, i32) {
    %c0_i32 = arith.constant 0 : i32
    %c0_i32_0 = arith.constant 0 : i32
    %c0_i32_1 = arith.constant 0 : i32
    return %c0_i32, %c0_i32_0 : i32, i32
  }
  func.func @transform_4(%arg0: i32) -> (i32, i32) {
    %c0_i32 = arith.constant 0 : i32
    %c0_i32_0 = arith.constant 0 : i32
    %c0_i32_1 = arith.constant 0 : i32
    return %c0_i32, %c0_i32_0 : i32, i32
  }
  func.func @transform_5(%arg0: i32) -> (i32, i32) {
    %c0_i32 = arith.constant 0 : i32
    %c0_i32_0 = arith.constant 0 : i32
    return %arg0, %c0_i32 : i32, i32
  }
}

module attributes {stable_mosaic.version = 11 : i64} {
  func.func @_seghead_kernel(%arg0: i32, %arg1: memref<1x10x10x128xf32, #tpu.memory_space<vmem>>, %arg2: memref<9x128xf32, #tpu.memory_space<vmem>>, %arg3: memref<128x128xbf16, #tpu.memory_space<vmem>>, %arg4: memref<16x64xf32, #tpu.memory_space<vmem>>, %arg5: memref<64x128xf32, #tpu.memory_space<vmem>>, %arg6: memref<16x128xf32, #tpu.memory_space<vmem>>) attributes {dimension_semantics = [#tpu.dimension_semantics<parallel>], iteration_bounds = array<i64: 2>, scalar_prefetch = 0 : i64, scratch_operands = 0 : i64, tpu.core_type = #tpu.core_type<tc>, window_params = [{transform_indices = @transform_0, window_bounds = array<i64: 1, 10, 10, 128>}, {pipeline_mode = #tpu.pipeline_mode<synchronous>, transform_indices = @transform_1, window_bounds = array<i64: 9, 128>}, {pipeline_mode = #tpu.pipeline_mode<synchronous>, transform_indices = @transform_2, window_bounds = array<i64: 128, 128>}, {pipeline_mode = #tpu.pipeline_mode<synchronous>, transform_indices = @transform_3, window_bounds = array<i64: 16, 64>}, {transform_indices = @transform_4, window_bounds = array<i64: 64, 128>}, {transform_indices = @transform_5, window_bounds = array<i64: 16, 128>}]} {
    %cst = arith.constant 0.000000e+00 : f32
    %0 = vector.broadcast %cst : f32 to vector<1x8x8x128xf32>
    %c0 = arith.constant 0 : index
    %c0_0 = arith.constant 0 : index
    %c0_1 = arith.constant 0 : index
    %c0_2 = arith.constant 0 : index
    %1 = vector.load %arg1[%c0, %c0_0, %c0_1, %c0_2] : memref<1x10x10x128xf32, #tpu.memory_space<vmem>>, vector<1x8x8x128xf32>
    %c0_3 = arith.constant 0 : index
    %c0_4 = arith.constant 0 : index
    %2 = vector.load %arg2[%c0_3, %c0_4] : memref<9x128xf32, #tpu.memory_space<vmem>>, vector<1x128xf32>
    %3 = vector.shape_cast %2 : vector<1x128xf32> to vector<1x1x1x128xf32>
    %4 = vector.broadcast %3 : vector<1x1x1x128xf32> to vector<1x8x8x128xf32>
    %5 = arith.mulf %1, %4 : vector<1x8x8x128xf32>
    %6 = arith.addf %0, %5 : vector<1x8x8x128xf32>
    %c0_5 = arith.constant 0 : index
    %c0_6 = arith.constant 0 : index
    %c1 = arith.constant 1 : index
    %c0_7 = arith.constant 0 : index
    %7 = vector.load %arg1[%c0_5, %c0_6, %c1, %c0_7] : memref<1x10x10x128xf32, #tpu.memory_space<vmem>>, vector<1x8x8x128xf32>
    %c1_8 = arith.constant 1 : index
    %c0_9 = arith.constant 0 : index
    %8 = vector.load %arg2[%c1_8, %c0_9] : memref<9x128xf32, #tpu.memory_space<vmem>>, vector<1x128xf32>
    %9 = vector.shape_cast %8 : vector<1x128xf32> to vector<1x1x1x128xf32>
    %10 = vector.broadcast %9 : vector<1x1x1x128xf32> to vector<1x8x8x128xf32>
    %11 = arith.mulf %7, %10 : vector<1x8x8x128xf32>
    %12 = arith.addf %6, %11 : vector<1x8x8x128xf32>
    %c0_10 = arith.constant 0 : index
    %c0_11 = arith.constant 0 : index
    %c2 = arith.constant 2 : index
    %c0_12 = arith.constant 0 : index
    %13 = vector.load %arg1[%c0_10, %c0_11, %c2, %c0_12] : memref<1x10x10x128xf32, #tpu.memory_space<vmem>>, vector<1x8x8x128xf32>
    %c2_13 = arith.constant 2 : index
    %c0_14 = arith.constant 0 : index
    %14 = vector.load %arg2[%c2_13, %c0_14] : memref<9x128xf32, #tpu.memory_space<vmem>>, vector<1x128xf32>
    %15 = vector.shape_cast %14 : vector<1x128xf32> to vector<1x1x1x128xf32>
    %16 = vector.broadcast %15 : vector<1x1x1x128xf32> to vector<1x8x8x128xf32>
    %17 = arith.mulf %13, %16 : vector<1x8x8x128xf32>
    %18 = arith.addf %12, %17 : vector<1x8x8x128xf32>
    %c0_15 = arith.constant 0 : index
    %c1_16 = arith.constant 1 : index
    %c0_17 = arith.constant 0 : index
    %c0_18 = arith.constant 0 : index
    %19 = vector.load %arg1[%c0_15, %c1_16, %c0_17, %c0_18] : memref<1x10x10x128xf32, #tpu.memory_space<vmem>>, vector<1x8x8x128xf32>
    %c3 = arith.constant 3 : index
    %c0_19 = arith.constant 0 : index
    %20 = vector.load %arg2[%c3, %c0_19] : memref<9x128xf32, #tpu.memory_space<vmem>>, vector<1x128xf32>
    %21 = vector.shape_cast %20 : vector<1x128xf32> to vector<1x1x1x128xf32>
    %22 = vector.broadcast %21 : vector<1x1x1x128xf32> to vector<1x8x8x128xf32>
    %23 = arith.mulf %19, %22 : vector<1x8x8x128xf32>
    %24 = arith.addf %18, %23 : vector<1x8x8x128xf32>
    %c0_20 = arith.constant 0 : index
    %c1_21 = arith.constant 1 : index
    %c1_22 = arith.constant 1 : index
    %c0_23 = arith.constant 0 : index
    %25 = vector.load %arg1[%c0_20, %c1_21, %c1_22, %c0_23] : memref<1x10x10x128xf32, #tpu.memory_space<vmem>>, vector<1x8x8x128xf32>
    %c4 = arith.constant 4 : index
    %c0_24 = arith.constant 0 : index
    %26 = vector.load %arg2[%c4, %c0_24] : memref<9x128xf32, #tpu.memory_space<vmem>>, vector<1x128xf32>
    %27 = vector.shape_cast %26 : vector<1x128xf32> to vector<1x1x1x128xf32>
    %28 = vector.broadcast %27 : vector<1x1x1x128xf32> to vector<1x8x8x128xf32>
    %29 = arith.mulf %25, %28 : vector<1x8x8x128xf32>
    %30 = arith.addf %24, %29 : vector<1x8x8x128xf32>
    %c0_25 = arith.constant 0 : index
    %c1_26 = arith.constant 1 : index
    %c2_27 = arith.constant 2 : index
    %c0_28 = arith.constant 0 : index
    %31 = vector.load %arg1[%c0_25, %c1_26, %c2_27, %c0_28] : memref<1x10x10x128xf32, #tpu.memory_space<vmem>>, vector<1x8x8x128xf32>
    %c5 = arith.constant 5 : index
    %c0_29 = arith.constant 0 : index
    %32 = vector.load %arg2[%c5, %c0_29] : memref<9x128xf32, #tpu.memory_space<vmem>>, vector<1x128xf32>
    %33 = vector.shape_cast %32 : vector<1x128xf32> to vector<1x1x1x128xf32>
    %34 = vector.broadcast %33 : vector<1x1x1x128xf32> to vector<1x8x8x128xf32>
    %35 = arith.mulf %31, %34 : vector<1x8x8x128xf32>
    %36 = arith.addf %30, %35 : vector<1x8x8x128xf32>
    %c0_30 = arith.constant 0 : index
    %c2_31 = arith.constant 2 : index
    %c0_32 = arith.constant 0 : index
    %c0_33 = arith.constant 0 : index
    %37 = vector.load %arg1[%c0_30, %c2_31, %c0_32, %c0_33] : memref<1x10x10x128xf32, #tpu.memory_space<vmem>>, vector<1x8x8x128xf32>
    %c6 = arith.constant 6 : index
    %c0_34 = arith.constant 0 : index
    %38 = vector.load %arg2[%c6, %c0_34] : memref<9x128xf32, #tpu.memory_space<vmem>>, vector<1x128xf32>
    %39 = vector.shape_cast %38 : vector<1x128xf32> to vector<1x1x1x128xf32>
    %40 = vector.broadcast %39 : vector<1x1x1x128xf32> to vector<1x8x8x128xf32>
    %41 = arith.mulf %37, %40 : vector<1x8x8x128xf32>
    %42 = arith.addf %36, %41 : vector<1x8x8x128xf32>
    %c0_35 = arith.constant 0 : index
    %c2_36 = arith.constant 2 : index
    %c1_37 = arith.constant 1 : index
    %c0_38 = arith.constant 0 : index
    %43 = vector.load %arg1[%c0_35, %c2_36, %c1_37, %c0_38] : memref<1x10x10x128xf32, #tpu.memory_space<vmem>>, vector<1x8x8x128xf32>
    %c7 = arith.constant 7 : index
    %c0_39 = arith.constant 0 : index
    %44 = vector.load %arg2[%c7, %c0_39] : memref<9x128xf32, #tpu.memory_space<vmem>>, vector<1x128xf32>
    %45 = vector.shape_cast %44 : vector<1x128xf32> to vector<1x1x1x128xf32>
    %46 = vector.broadcast %45 : vector<1x1x1x128xf32> to vector<1x8x8x128xf32>
    %47 = arith.mulf %43, %46 : vector<1x8x8x128xf32>
    %48 = arith.addf %42, %47 : vector<1x8x8x128xf32>
    %c0_40 = arith.constant 0 : index
    %c2_41 = arith.constant 2 : index
    %c2_42 = arith.constant 2 : index
    %c0_43 = arith.constant 0 : index
    %49 = vector.load %arg1[%c0_40, %c2_41, %c2_42, %c0_43] : memref<1x10x10x128xf32, #tpu.memory_space<vmem>>, vector<1x8x8x128xf32>
    %c8 = arith.constant 8 : index
    %c0_44 = arith.constant 0 : index
    %50 = vector.load %arg2[%c8, %c0_44] : memref<9x128xf32, #tpu.memory_space<vmem>>, vector<1x128xf32>
    %51 = vector.shape_cast %50 : vector<1x128xf32> to vector<1x1x1x128xf32>
    %52 = vector.broadcast %51 : vector<1x1x1x128xf32> to vector<1x8x8x128xf32>
    %53 = arith.mulf %49, %52 : vector<1x8x8x128xf32>
    %54 = arith.addf %48, %53 : vector<1x8x8x128xf32>
    %55 = vector.shape_cast %54 : vector<1x8x8x128xf32> to vector<64x128xf32>
    %56 = arith.truncf %55 : vector<64x128xf32> to vector<64x128xbf16>
    %c0_45 = arith.constant 0 : index
    %c0_46 = arith.constant 0 : index
    %57 = vector.load %arg3[%c0_45, %c0_46] : memref<128x128xbf16, #tpu.memory_space<vmem>>, vector<128x128xbf16>
    %cst_47 = arith.constant dense<0.000000e+00> : vector<64x128xf32>
    %58 = tpu.matmul %56, %57, %cst_47 {dimension_numbers = #tpu.dot_dimension_numbers<[1], [0], [0], [1], [0, 0, 1, 1], [], []>} : vector<64x128xbf16>, vector<128x128xbf16>, vector<64x128xf32> -> vector<64x128xf32>
    %c0_48 = arith.constant 0 : index
    %c0_49 = arith.constant 0 : index
    %59 = vector.load %arg5[%c0_48, %c0_49] : memref<64x128xf32, #tpu.memory_space<vmem>>, vector<64x128xf32>
    tpu.vector_store %arg5[%c0_48, %c0_49], %58 {strides = array<i32>} : memref<64x128xf32, #tpu.memory_space<vmem>>, vector<64x128xf32>,
    %60 = tpu.iota {dimensions = array<i32: 1>} : vector<64x128xi32>
    %c8_i32 = arith.constant 8 : i32
    %61 = vector.broadcast %c8_i32 : i32 to vector<64x128xi32>
    %62 = arith.cmpi slt, %60, %61 : vector<64x128xi32>
    %cst_50 = arith.constant -1.000000e+30 : f32
    %63 = vector.broadcast %cst_50 : f32 to vector<64x128xf32>
    %64 = arith.select %62, %58, %63 : vector<64x128xi1>, vector<64x128xf32>
    %cst_51 = arith.constant dense<0xFF800000> : vector<64xf32>
    %65 = vector.multi_reduction <maximumf>, %64, %cst_51 [1] : vector<64x128xf32> to vector<64xf32>
    %66 = vector.shape_cast %65 : vector<64xf32> to vector<64x1xf32>
    %67 = vector.broadcast %66 : vector<64x1xf32> to vector<64x128xf32>
    %68 = arith.subf %64, %67 : vector<64x128xf32>
    %69 = math.exp %68 : vector<64x128xf32>
    %cst_52 = arith.constant dense<0.000000e+00> : vector<64xf32>
    %70 = vector.multi_reduction <add>, %69, %cst_52 [1] : vector<64x128xf32> to vector<64xf32>
    %71 = vector.shape_cast %70 : vector<64xf32> to vector<64x1xf32>
    %72 = tpu.reciprocal %71 {approx = true} : vector<64x1xf32> -> vector<64x1xf32>
    %73 = vector.broadcast %72 : vector<64x1xf32> to vector<64x128xf32>
    %74 = arith.mulf %69, %73 : vector<64x128xf32>
    %c0_53 = arith.constant 0 : index
    %c0_54 = arith.constant 0 : index
    %75 = vector.load %arg4[%c0_53, %c0_54] : memref<16x64xf32, #tpu.memory_space<vmem>>, vector<16x64xf32>
    %cst_55 = arith.constant dense<0.000000e+00> : vector<16x128xf32>
    %76 = tpu.matmul %75, %74, %cst_55 {dimension_numbers = #tpu.dot_dimension_numbers<[1], [0], [0], [1], [0, 0, 1, 1], [], []>} : vector<16x64xf32>, vector<64x128xf32>, vector<16x128xf32> -> vector<16x128xf32>
    %c0_56 = arith.constant 0 : index
    %c0_57 = arith.constant 0 : index
    %77 = vector.load %arg6[%c0_56, %c0_57] : memref<16x128xf32, #tpu.memory_space<vmem>>, vector<16x128xf32>
    tpu.vector_store %arg6[%c0_56, %c0_57], %76 {strides = array<i32>} : memref<16x128xf32, #tpu.memory_space<vmem>>, vector<16x128xf32>,
    return
  }
  func.func @transform_0(%arg0: i32) -> (i32, i32, i32, i32) {
    %c0_i32 = arith.constant 0 : i32
    %c0_i32_0 = arith.constant 0 : i32
    %c0_i32_1 = arith.constant 0 : i32
    %c0_i32_2 = arith.constant 0 : i32
    return %arg0, %c0_i32, %c0_i32_0, %c0_i32_1 : i32, i32, i32, i32
  }
  func.func @transform_1(%arg0: i32) -> (i32, i32) {
    %c0_i32 = arith.constant 0 : i32
    %c0_i32_0 = arith.constant 0 : i32
    %c0_i32_1 = arith.constant 0 : i32
    return %c0_i32, %c0_i32_0 : i32, i32
  }
  func.func @transform_2(%arg0: i32) -> (i32, i32) {
    %c0_i32 = arith.constant 0 : i32
    %c0_i32_0 = arith.constant 0 : i32
    %c0_i32_1 = arith.constant 0 : i32
    return %c0_i32, %c0_i32_0 : i32, i32
  }
  func.func @transform_3(%arg0: i32) -> (i32, i32) {
    %c0_i32 = arith.constant 0 : i32
    %c0_i32_0 = arith.constant 0 : i32
    %c0_i32_1 = arith.constant 0 : i32
    return %c0_i32, %c0_i32_0 : i32, i32
  }
  func.func @transform_4(%arg0: i32) -> (i32, i32) {
    %c0_i32 = arith.constant 0 : i32
    %c0_i32_0 = arith.constant 0 : i32
    return %arg0, %c0_i32 : i32, i32
  }
  func.func @transform_5(%arg0: i32) -> (i32, i32) {
    %c0_i32 = arith.constant 0 : i32
    %c0_i32_0 = arith.constant 0 : i32
    return %arg0, %c0_i32 : i32, i32
  }
}

module attributes {stable_mosaic.version = 11 : i64} {
  func.func @_classifier_kernel(%arg0: i32, %arg1: memref<2x128xf32, #tpu.memory_space<vmem>>, %arg2: memref<128x128xbf16, #tpu.memory_space<vmem>>, %arg3: memref<1x128xf32, #tpu.memory_space<vmem>>, %arg4: memref<128x128xbf16, #tpu.memory_space<vmem>>, %arg5: memref<1x128xf32, #tpu.memory_space<vmem>>, %arg6: memref<128x128xbf16, #tpu.memory_space<vmem>>, %arg7: memref<1x128xf32, #tpu.memory_space<vmem>>, %arg8: memref<2x128xf32, #tpu.memory_space<vmem>>) attributes {dimension_semantics = [#tpu.dimension_semantics<arbitrary>], iteration_bounds = array<i64: 1>, scalar_prefetch = 0 : i64, scratch_operands = 0 : i64, tpu.core_type = #tpu.core_type<tc>, window_params = [{pipeline_mode = #tpu.pipeline_mode<synchronous>, transform_indices = @transform_0, window_bounds = array<i64: 2, 128>}, {pipeline_mode = #tpu.pipeline_mode<synchronous>, transform_indices = @transform_1, window_bounds = array<i64: 128, 128>}, {pipeline_mode = #tpu.pipeline_mode<synchronous>, transform_indices = @transform_2, window_bounds = array<i64: 1, 128>}, {pipeline_mode = #tpu.pipeline_mode<synchronous>, transform_indices = @transform_3, window_bounds = array<i64: 128, 128>}, {pipeline_mode = #tpu.pipeline_mode<synchronous>, transform_indices = @transform_4, window_bounds = array<i64: 1, 128>}, {pipeline_mode = #tpu.pipeline_mode<synchronous>, transform_indices = @transform_5, window_bounds = array<i64: 128, 128>}, {pipeline_mode = #tpu.pipeline_mode<synchronous>, transform_indices = @transform_6, window_bounds = array<i64: 1, 128>}, {pipeline_mode = #tpu.pipeline_mode<synchronous>, transform_indices = @transform_7, window_bounds = array<i64: 2, 128>}]} {
    %c0 = arith.constant 0 : index
    %c0_0 = arith.constant 0 : index
    %0 = vector.load %arg1[%c0, %c0_0] : memref<2x128xf32, #tpu.memory_space<vmem>>, vector<2x128xf32>
    %1 = arith.truncf %0 : vector<2x128xf32> to vector<2x128xbf16>
    %c0_1 = arith.constant 0 : index
    %c0_2 = arith.constant 0 : index
    %2 = vector.load %arg2[%c0_1, %c0_2] : memref<128x128xbf16, #tpu.memory_space<vmem>>, vector<128x128xbf16>
    %cst = arith.constant dense<0.000000e+00> : vector<2x128xf32>
    %3 = tpu.matmul %1, %2, %cst {dimension_numbers = #tpu.dot_dimension_numbers<[1], [0], [0], [1], [0, 0, 1, 1], [], []>} : vector<2x128xbf16>, vector<128x128xbf16>, vector<2x128xf32> -> vector<2x128xf32>
    %c0_3 = arith.constant 0 : index
    %c0_4 = arith.constant 0 : index
    %4 = vector.load %arg3[%c0_3, %c0_4] : memref<1x128xf32, #tpu.memory_space<vmem>>, vector<1x128xf32>
    %5 = vector.broadcast %4 : vector<1x128xf32> to vector<2x128xf32>
    %6 = arith.addf %3, %5 : vector<2x128xf32>
    %cst_5 = arith.constant 5.000000e-01 : f32
    %7 = vector.broadcast %cst_5 : f32 to vector<2x128xf32>
    %8 = arith.mulf %7, %6 : vector<2x128xf32>
    %cst_6 = arith.constant 4.471500e-02 : f32
    %9 = vector.broadcast %cst_6 : f32 to vector<2x128xf32>
    %10 = arith.mulf %9, %6 : vector<2x128xf32>
    %11 = arith.mulf %10, %6 : vector<2x128xf32>
    %12 = arith.mulf %11, %6 : vector<2x128xf32>
    %13 = arith.addf %6, %12 : vector<2x128xf32>
    %cst_7 = arith.constant 0.797884583 : f32
    %14 = vector.broadcast %cst_7 : f32 to vector<2x128xf32>
    %15 = arith.mulf %14, %13 : vector<2x128xf32>
    %16 = math.tanh %15 : vector<2x128xf32>
    %cst_8 = arith.constant 1.000000e+00 : f32
    %17 = vector.broadcast %cst_8 : f32 to vector<2x128xf32>
    %18 = arith.addf %17, %16 : vector<2x128xf32>
    %19 = arith.mulf %8, %18 : vector<2x128xf32>
    %20 = arith.truncf %19 : vector<2x128xf32> to vector<2x128xbf16>
    %c0_9 = arith.constant 0 : index
    %c0_10 = arith.constant 0 : index
    %21 = vector.load %arg4[%c0_9, %c0_10] : memref<128x128xbf16, #tpu.memory_space<vmem>>, vector<128x128xbf16>
    %cst_11 = arith.constant dense<0.000000e+00> : vector<2x128xf32>
    %22 = tpu.matmul %20, %21, %cst_11 {dimension_numbers = #tpu.dot_dimension_numbers<[1], [0], [0], [1], [0, 0, 1, 1], [], []>} : vector<2x128xbf16>, vector<128x128xbf16>, vector<2x128xf32> -> vector<2x128xf32>
    %c0_12 = arith.constant 0 : index
    %c0_13 = arith.constant 0 : index
    %23 = vector.load %arg5[%c0_12, %c0_13] : memref<1x128xf32, #tpu.memory_space<vmem>>, vector<1x128xf32>
    %24 = vector.broadcast %23 : vector<1x128xf32> to vector<2x128xf32>
    %25 = arith.addf %22, %24 : vector<2x128xf32>
    %cst_14 = arith.constant 5.000000e-01 : f32
    %26 = vector.broadcast %cst_14 : f32 to vector<2x128xf32>
    %27 = arith.mulf %26, %25 : vector<2x128xf32>
    %cst_15 = arith.constant 4.471500e-02 : f32
    %28 = vector.broadcast %cst_15 : f32 to vector<2x128xf32>
    %29 = arith.mulf %28, %25 : vector<2x128xf32>
    %30 = arith.mulf %29, %25 : vector<2x128xf32>
    %31 = arith.mulf %30, %25 : vector<2x128xf32>
    %32 = arith.addf %25, %31 : vector<2x128xf32>
    %cst_16 = arith.constant 0.797884583 : f32
    %33 = vector.broadcast %cst_16 : f32 to vector<2x128xf32>
    %34 = arith.mulf %33, %32 : vector<2x128xf32>
    %35 = math.tanh %34 : vector<2x128xf32>
    %cst_17 = arith.constant 1.000000e+00 : f32
    %36 = vector.broadcast %cst_17 : f32 to vector<2x128xf32>
    %37 = arith.addf %36, %35 : vector<2x128xf32>
    %38 = arith.mulf %27, %37 : vector<2x128xf32>
    %39 = arith.truncf %38 : vector<2x128xf32> to vector<2x128xbf16>
    %c0_18 = arith.constant 0 : index
    %c0_19 = arith.constant 0 : index
    %40 = vector.load %arg6[%c0_18, %c0_19] : memref<128x128xbf16, #tpu.memory_space<vmem>>, vector<128x128xbf16>
    %cst_20 = arith.constant dense<0.000000e+00> : vector<2x128xf32>
    %41 = tpu.matmul %39, %40, %cst_20 {dimension_numbers = #tpu.dot_dimension_numbers<[1], [0], [0], [1], [0, 0, 1, 1], [], []>} : vector<2x128xbf16>, vector<128x128xbf16>, vector<2x128xf32> -> vector<2x128xf32>
    %c0_21 = arith.constant 0 : index
    %c0_22 = arith.constant 0 : index
    %42 = vector.load %arg7[%c0_21, %c0_22] : memref<1x128xf32, #tpu.memory_space<vmem>>, vector<1x128xf32>
    %43 = vector.broadcast %42 : vector<1x128xf32> to vector<2x128xf32>
    %44 = arith.addf %41, %43 : vector<2x128xf32>
    %c0_23 = arith.constant 0 : index
    %c0_24 = arith.constant 0 : index
    %45 = vector.load %arg8[%c0_23, %c0_24] : memref<2x128xf32, #tpu.memory_space<vmem>>, vector<2x128xf32>
    tpu.vector_store %arg8[%c0_23, %c0_24], %44 {strides = array<i32>} : memref<2x128xf32, #tpu.memory_space<vmem>>, vector<2x128xf32>,
    return
  }
  func.func @transform_0(%arg0: i32) -> (i32, i32) {
    %c0_i32 = arith.constant 0 : i32
    %c0_i32_0 = arith.constant 0 : i32
    %c0_i32_1 = arith.constant 0 : i32
    return %c0_i32, %c0_i32_0 : i32, i32
  }
  func.func @transform_1(%arg0: i32) -> (i32, i32) {
    %c0_i32 = arith.constant 0 : i32
    %c0_i32_0 = arith.constant 0 : i32
    %c0_i32_1 = arith.constant 0 : i32
    return %c0_i32, %c0_i32_0 : i32, i32
  }
  func.func @transform_2(%arg0: i32) -> (i32, i32) {
    %c0_i32 = arith.constant 0 : i32
    %c0_i32_0 = arith.constant 0 : i32
    %c0_i32_1 = arith.constant 0 : i32
    return %c0_i32, %c0_i32_0 : i32, i32
  }
  func.func @transform_3(%arg0: i32) -> (i32, i32) {
    %c0_i32 = arith.constant 0 : i32
    %c0_i32_0 = arith.constant 0 : i32
    %c0_i32_1 = arith.constant 0 : i32
    return %c0_i32, %c0_i32_0 : i32, i32
  }
  func.func @transform_4(%arg0: i32) -> (i32, i32) {
    %c0_i32 = arith.constant 0 : i32
    %c0_i32_0 = arith.constant 0 : i32
    %c0_i32_1 = arith.constant 0 : i32
    return %c0_i32, %c0_i32_0 : i32, i32
  }
  func.func @transform_5(%arg0: i32) -> (i32, i32) {
    %c0_i32 = arith.constant 0 : i32
    %c0_i32_0 = arith.constant 0 : i32
    %c0_i32_1 = arith.constant 0 : i32
    return %c0_i32, %c0_i32_0 : i32, i32
  }
  func.func @transform_6(%arg0: i32) -> (i32, i32) {
    %c0_i32 = arith.constant 0 : i32
    %c0_i32_0 = arith.constant 0 : i32
    %c0_i32_1 = arith.constant 0 : i32
    return %c0_i32, %c0_i32_0 : i32, i32
  }
  func.func @transform_7(%arg0: i32) -> (i32, i32) {
    %c0_i32 = arith.constant 0 : i32
    %c0_i32_0 = arith.constant 0 : i32
    %c0_i32_1 = arith.constant 0 : i32
    return %c0_i32, %c0_i32_0 : i32, i32
  }
}

</mosaic_0001>

<llo_original>
// kernel: twostage_part_model.5
$region0: #{twostage_part_model.5}
  #allocation0 [shape = 'u32[]', space=smem, size = 0x4, offset = 0x4, fixed_abs, tag = 'smem constant byte address 0x4 - core index']
  #allocation1 [shape = 'u32[144,128]{1,0:T(1,128)}', space=vmem, size = 0x12000, scoped, tag = 'internal scratch']
  %s0 = inlined_call_operand.vmem [shape: f32[2,128], index: 0, kind: input, shape index: {}]
  %s1 = inlined_call_operand.vmem [shape: bf16[128,128], index: 1, kind: input, shape index: {}]
  %s2 = inlined_call_operand.vmem [shape: f32[1,128], index: 2, kind: input, shape index: {}]
  %s3 = inlined_call_operand.vmem [shape: bf16[128,128], index: 3, kind: input, shape index: {}]
  %s4 = inlined_call_operand.vmem [shape: f32[1,128], index: 4, kind: input, shape index: {}]
  %s5 = inlined_call_operand.vmem [shape: bf16[128,128], index: 5, kind: input, shape index: {}]
  %s6 = inlined_call_operand.vmem [shape: f32[1,128], index: 6, kind: input, shape index: {}]
  %s7 = inlined_call_operand.hbm [shape: f32[2,128], index: 7, kind: output, shape index: {}]
  %s8 = sld [smem:[#allocation0]]
  $region38: #{twostage_part_model.5} parent=0
    _
  %s10 = ssub.s32 1, %s8
  %s11 = scalar_select 0, %s10, %s8
  $region1: #{twostage_part_model.5} parent=0
    #allocation2 [shape = 'u8[1024]{0}', space=vmem, size = 0x400, scoped, tag = 'output window, operand 0, single buffered']
    #allocation3 [shape = 's32[1]{0}', space=sflag, size = 0x4, scoped, tag = 'scoped memory for twostage_part_model.5']
    %12 = vsyncpa [#allocation3], 0
    // Predicated region
    $region2: #{twostage_part_model.5} parent=1 // pred_check
      _
    $region3: #{twostage_part_model.5} parent=1 // pred_check_branch
      %14 = sbr.rel (0) target = $region5
    $region4: #{twostage_part_model.5} parent=1 // pred_region
      _
    $region5: #{twostage_part_model.5} parent=1 // pred_fallthru
      _
    // Predicated region
    $region6: #{twostage_part_model.5} parent=1 // pred_check
      _
    $region7: #{twostage_part_model.5} parent=1 // pred_check_branch
      %16 = sbr.rel (0) target = $region9
    $region8: #{twostage_part_model.5} parent=1 // pred_region
      _
    $region9: #{twostage_part_model.5} parent=1 // pred_fallthru
      _
    // Predicated region
    $region10: #{twostage_part_model.5} parent=1 // pred_check
      _
    $region11: #{twostage_part_model.5} parent=1 // pred_check_branch
      %18 = sbr.rel (0) target = $region13
    $region12: #{twostage_part_model.5} parent=1 // pred_region
      _
    $region13: #{twostage_part_model.5} parent=1 // pred_fallthru
      _
    // Predicated region
    $region14: #{twostage_part_model.5} parent=1 // pred_check
      _
    $region15: #{twostage_part_model.5} parent=1 // pred_check_branch
      %20 = sbr.rel (0) target = $region17
    $region16: #{twostage_part_model.5} parent=1 // pred_region
      _
    $region17: #{twostage_part_model.5} parent=1 // pred_fallthru
      _
    // Predicated region
    $region18: #{twostage_part_model.5} parent=1 // pred_check
      _
    $region19: #{twostage_part_model.5} parent=1 // pred_check_branch
      %22 = sbr.rel (0) target = $region21
    $region20: #{twostage_part_model.5} parent=1 // pred_region
      _
    $region21: #{twostage_part_model.5} parent=1 // pred_fallthru
      _
    // Predicated region
    $region22: #{twostage_part_model.5} parent=1 // pred_check
      _
    $region23: #{twostage_part_model.5} parent=1 // pred_check_branch
      %24 = sbr.rel (0) target = $region25
    $region24: #{twostage_part_model.5} parent=1 // pred_region
      _
    $region25: #{twostage_part_model.5} parent=1 // pred_fallthru
      _
    // Predicated region
    $region26: #{twostage_part_model.5} parent=1 // pred_check
      _
    $region27: #{twostage_part_model.5} parent=1 // pred_check_branch
      %26 = sbr.rel (0) target = $region29
    $region28: #{twostage_part_model.5} parent=1 // pred_region
      _
    $region29: #{twostage_part_model.5} parent=1 // pred_fallthru
      _
    %v28 = vld [vmem:[%s0] sm:$0x3]
    %v29 = vpack.c.bf16 %v28, %v28
    %v30 = vld [vmem:[%s1] sm:$0xf]
    %v31 = vld [vmem:[%s1 + $0x4] sm:$0xf]
    %v32 = vld [vmem:[%s1 + $0x8] sm:$0xf]
    %v33 = vld [vmem:[%s1 + $0xc] sm:$0xf]
    %v34 = vld [vmem:[%s1 + $0x10] sm:$0xf]
    %v35 = vld [vmem:[%s1 + $0x14] sm:$0xf]
    %v36 = vld [vmem:[%s1 + $0x18] sm:$0xf]
    %v37 = vld [vmem:[%s1 + $0x1c] sm:$0xf]
    %v38 = vld [vmem:[%s1 + $0x20] sm:$0xf]
    %v39 = vld [vmem:[%s1 + $0x24] sm:$0xf]
    %v40 = vld [vmem:[%s1 + $0x28] sm:$0xf]
    %v41 = vld [vmem:[%s1 + $0x2c] sm:$0xf]
    %v42 = vld [vmem:[%s1 + $0x30] sm:$0xf]
    %v43 = vld [vmem:[%s1 + $0x34] sm:$0xf]
    %v44 = vld [vmem:[%s1 + $0x38] sm:$0xf]
    %v45 = vld [vmem:[%s1 + $0x3c] sm:$0xf]
    %v46 = vld [vmem:[%s2] sm:$0x1]
    %v48 = vlaneseq
    %v49 = vshrl.u32 %v48, 7
    %v50 = vsub.s32 0, %v49
    %v51 = vrot.slane %v46, %v50
    %v69 = vunpack.c.l.b16 %v30
    %v70 = vunpack.c.l.b16 %v31
    %v71 = vunpack.c.l.b16 %v32
    %v72 = vunpack.c.l.b16 %v33
    %v73 = vunpack.c.l.b16 %v34
    %v74 = vunpack.c.l.b16 %v35
    %v75 = vunpack.c.l.b16 %v36
    %v76 = vunpack.c.l.b16 %v37
    %v77 = vunpack.c.l.b16 %v38
    %v78 = vunpack.c.l.b16 %v39
    %v79 = vunpack.c.l.b16 %v40
    %v80 = vunpack.c.l.b16 %v41
    %v81 = vunpack.c.l.b16 %v42
    %v82 = vunpack.c.l.b16 %v43
    %v83 = vunpack.c.l.b16 %v44
    %v84 = vunpack.c.l.b16 %v45
    %v85 = vpack.c.b16 %v70, %v69
    %v86 = vpack.c.b16 %v72, %v71
    %v87 = vpack.c.b16 %v74, %v73
    %v88 = vpack.c.b16 %v76, %v75
    %v89 = vpack.c.b16 %v78, %v77
    %v90 = vpack.c.b16 %v80, %v79
    %v91 = vpack.c.b16 %v82, %v81
    %v92 = vpack.c.b16 %v84, %v83
    %101 = vmatprep.subr.bf16.mxu0 0
    %102 = vmatpush1.bf16.msra.mxu0 %v85
    %103 = vmatprep.subr.bf16.mxu0 0
    %104 = vmatpush1.bf16.msra.mxu0 %v86
    %105 = vmatprep.subr.bf16.mxu0 0
    %106 = vmatpush1.bf16.msra.mxu0 %v87
    %107 = vmatprep.subr.bf16.mxu0 0
    %108 = vmatpush1.bf16.msra.mxu0 %v88
    %109 = vmatprep.subr.bf16.mxu0 0
    %110 = vmatpush1.bf16.msra.mxu0 %v89
    %111 = vmatprep.subr.bf16.mxu0 0
    %112 = vmatpush1.bf16.msra.mxu0 %v90
    %113 = vmatprep.subr.bf16.mxu0 0
    %114 = vmatpush1.bf16.msra.mxu0 %v91
    %115 = vmatprep.subr.bf16.mxu0 0
    %116 = vmatpush1.bf16.msra.mxu0 %v92
    %117 = vmatprep.subr.bf16.mxu0 0
    %118 = vmatpush1.bf16.msra.mxu0 0
    %119 = vmatprep.subr.bf16.mxu0 0
    %120 = vmatpush1.bf16.msra.mxu0 0
    %121 = vmatprep.subr.bf16.mxu0 0
    %122 = vmatpush1.bf16.msra.mxu0 0
    %123 = vmatprep.subr.bf16.mxu0 0
    %124 = vmatpush1.bf16.msra.mxu0 0
    %125 = vmatprep.subr.bf16.mxu0 0
    %126 = vmatpush1.bf16.msra.mxu0 0
    %127 = vmatprep.subr.bf16.mxu0 0
    %128 = vmatpush1.bf16.msra.mxu0 0
    %129 = vmatprep.subr.bf16.mxu0 0
    %130 = vmatpush1.bf16.msra.mxu0 0
    %131 = vmatprep.subr.bf16.mxu0 0
    %132 = vmatpush1.bf16.msra.mxu0 0
    %133 = vmatprep.mubr.bf16.mxu0 0
    %134 = vmatmul.mubr.bf16.gmra.mrb[0].mxu0 %v29
    %v135 = vpop.f32.mrb[0].mxu0
    %v136 = vadd.f32 %v51, %v135
    %v137 = vpop.f32.mrb[0].mxu0
    %v138 = vpop.f32.mrb[0].mxu0
    %v139 = vpop.f32.mrb[0].mxu0
    %140 = vdwg.mxu0
    %v141 = vmul.f32 %v136, 0.5
    %v142 = vmul.f32 %v136, 0.044715
    %v143 = vmul.f32 %v142, %v136
    %v144 = vmul.f32 %v143, %v136
    %v145 = vadd.f32 %v136, %v144
    %v146 = vmul.f32 %v145, 0.7978846
    %v147 = vtanh.pop %v146
    %v148 = vadd.f32 %v147, 1.0
    %v149 = vmul.f32 %v141, %v148
    %v150 = vpack.c.bf16 %v149, %v149
    %v151 = vld [vmem:[%s3] sm:$0xf]
    %v152 = vld [vmem:[%s3 + $0x4] sm:$0xf]
    %v153 = vld [vmem:[%s3 + $0x8] sm:$0xf]
    %v154 = vld [vmem:[%s3 + $0xc] sm:$0xf]
    %v155 = vld [vmem:[%s3 + $0x10] sm:$0xf]
    %v156 = vld [vmem:[%s3 + $0x14] sm:$0xf]
    %v157 = vld [vmem:[%s3 + $0x18] sm:$0xf]
    %v158 = vld [vmem:[%s3 + $0x1c] sm:$0xf]
    %v159 = vld [vmem:[%s3 + $0x20] sm:$0xf]
    %v160 = vld [vmem:[%s3 + $0x24] sm:$0xf]
    %v161 = vld [vmem:[%s3 + $0x28] sm:$0xf]
    %v162 = vld [vmem:[%s3 + $0x2c] sm:$0xf]
    %v163 = vld [vmem:[%s3 + $0x30] sm:$0xf]
    %v164 = vld [vmem:[%s3 + $0x34] sm:$0xf]
    %v165 = vld [vmem:[%s3 + $0x38] sm:$0xf]
    %v166 = vld [vmem:[%s3 + $0x3c] sm:$0xf]
    %v167 = vld [vmem:[%s4] sm:$0x1]
    %v169 = vlaneseq
    %v170 = vshrl.u32 %v169, 7
    %v171 = vsub.s32 0, %v170
    %v172 = vrot.slane %v167, %v171
    %v190 = vunpack.c.l.b16 %v151
    %v191 = vunpack.c.l.b16 %v152
    %v192 = vunpack.c.l.b16 %v153
    %v193 = vunpack.c.l.b16 %v154
    %v194 = vunpack.c.l.b16 %v155
    %v195 = vunpack.c.l.b16 %v156
    %v196 = vunpack.c.l.b16 %v157
    %v197 = vunpack.c.l.b16 %v158
    %v198 = vunpack.c.l.b16 %v159
    %v199 = vunpack.c.l.b16 %v160
    %v200 = vunpack.c.l.b16 %v161
    %v201 = vunpack.c.l.b16 %v162
    %v202 = vunpack.c.l.b16 %v163
    %v203 = vunpack.c.l.b16 %v164
    %v204 = vunpack.c.l.b16 %v165
    %v205 = vunpack.c.l.b16 %v166
    %v206 = vpack.c.b16 %v191, %v190
    %v207 = vpack.c.b16 %v193, %v192
    %v208 = vpack.c.b16 %v195, %v194
    %v209 = vpack.c.b16 %v197, %v196
    %v210 = vpack.c.b16 %v199, %v198
    %v211 = vpack.c.b16 %v201, %v200
    %v212 = vpack.c.b16 %v203, %v202
    %v213 = vpack.c.b16 %v205, %v204
    %222 = vmatprep.subr.bf16.mxu0 0
    %223 = vmatpush1.bf16.msra.mxu0 %v206
    %224 = vmatprep.subr.bf16.mxu0 0
    %225 = vmatpush1.bf16.msra.mxu0 %v207
    %226 = vmatprep.subr.bf16.mxu0 0
    %227 = vmatpush1.bf16.msra.mxu0 %v208
    %228 = vmatprep.subr.bf16.mxu0 0
    %229 = vmatpush1.bf16.msra.mxu0 %v209
    %230 = vmatprep.subr.bf16.mxu0 0
    %231 = vmatpush1.bf16.msra.mxu0 %v210
    %232 = vmatprep.subr.bf16.mxu0 0
    %233 = vmatpush1.bf16.msra.mxu0 %v211
    %234 = vmatprep.subr.bf16.mxu0 0
    %235 = vmatpush1.bf16.msra.mxu0 %v212
    %236 = vmatprep.subr.bf16.mxu0 0
    %237 = vmatpush1.bf16.msra.mxu0 %v213
    %238 = vmatprep.subr.bf16.mxu0 0
    %239 = vmatpush1.bf16.msra.mxu0 0
    %240 = vmatprep.subr.bf16.mxu0 0
    %241 = vmatpush1.bf16.msra.mxu0 0
    %242 = vmatprep.subr.bf16.mxu0 0
    %243 = vmatpush1.bf16.msra.mxu0 0
    %244 = vmatprep.subr.bf16.mxu0 0
    %245 = vmatpush1.bf16.msra.mxu0 0
    %246 = vmatprep.subr.bf16.mxu0 0
    %247 = vmatpush1.bf16.msra.mxu0 0
    %248 = vmatprep.subr.bf16.mxu0 0
    %249 = vmatpush1.bf16.msra.mxu0 0
    %250 = vmatprep.subr.bf16.mxu0 0
    %251 = vmatpush1.bf16.msra.mxu0 0
    %252 = vmatprep.subr.bf16.mxu0 0
    %253 = vmatpush1.bf16.msra.mxu0 0
    %254 = vmatprep.mubr.bf16.mxu0 0
    %255 = vmatmul.mubr.bf16.gmra.mrb[0].mxu0 %v150
    %v256 = vpop.f32.mrb[0].mxu0
    %v257 = vadd.f32 %v172, %v256
    %v258 = vpop.f32.mrb[0].mxu0
    %v259 = vpop.f32.mrb[0].mxu0
    %v260 = vpop.f32.mrb[0].mxu0
    %261 = vdwg.mxu0
    %v262 = vmul.f32 %v257, 0.5
    %v263 = vmul.f32 %v257, 0.044715
    %v264 = vmul.f32 %v263, %v257
    %v265 = vmul.f32 %v264, %v257
    %v266 = vadd.f32 %v257, %v265
    %v267 = vmul.f32 %v266, 0.7978846
    %v268 = vtanh.pop %v267
    %v269 = vadd.f32 %v268, 1.0
    %v270 = vmul.f32 %v262, %v269
    %v271 = vpack.c.bf16 %v270, %v270
    %v272 = vld [vmem:[%s5] sm:$0xf]
    %v273 = vld [vmem:[%s5 + $0x4] sm:$0xf]
    %v274 = vld [vmem:[%s5 + $0x8] sm:$0xf]
    %v275 = vld [vmem:[%s5 + $0xc] sm:$0xf]
    %v276 = vld [vmem:[%s5 + $0x10] sm:$0xf]
    %v277 = vld [vmem:[%s5 + $0x14] sm:$0xf]
    %v278 = vld [vmem:[%s5 + $0x18] sm:$0xf]
    %v279 = vld [vmem:[%s5 + $0x1c] sm:$0xf]
    %v280 = vld [vmem:[%s5 + $0x20] sm:$0xf]
    %v281 = vld [vmem:[%s5 + $0x24] sm:$0xf]
    %v282 = vld [vmem:[%s5 + $0x28] sm:$0xf]
    %v283 = vld [vmem:[%s5 + $0x2c] sm:$0xf]
    %v284 = vld [vmem:[%s5 + $0x30] sm:$0xf]
    %v285 = vld [vmem:[%s5 + $0x34] sm:$0xf]
    %v286 = vld [vmem:[%s5 + $0x38] sm:$0xf]
    %v287 = vld [vmem:[%s5 + $0x3c] sm:$0xf]
    %v288 = vld [vmem:[%s6] sm:$0x1]
    %v290 = vlaneseq
    %v291 = vshrl.u32 %v290, 7
    %v292 = vsub.s32 0, %v291
    %v293 = vrot.slane %v288, %v292
    %v311 = vunpack.c.l.b16 %v272
    %v312 = vunpack.c.l.b16 %v273
    %v313 = vunpack.c.l.b16 %v274
    %v314 = vunpack.c.l.b16 %v275
    %v315 = vunpack.c.l.b16 %v276
    %v316 = vunpack.c.l.b16 %v277
    %v317 = vunpack.c.l.b16 %v278
    %v318 = vunpack.c.l.b16 %v279
    %v319 = vunpack.c.l.b16 %v280
    %v320 = vunpack.c.l.b16 %v281
    %v321 = vunpack.c.l.b16 %v282
    %v322 = vunpack.c.l.b16 %v283
    %v323 = vunpack.c.l.b16 %v284
    %v324 = vunpack.c.l.b16 %v285
    %v325 = vunpack.c.l.b16 %v286
    %v326 = vunpack.c.l.b16 %v287
    %v327 = vpack.c.b16 %v312, %v311
    %v328 = vpack.c.b16 %v314, %v313
    %v329 = vpack.c.b16 %v316, %v315
    %v330 = vpack.c.b16 %v318, %v317
    %v331 = vpack.c.b16 %v320, %v319
    %v332 = vpack.c.b16 %v322, %v321
    %v333 = vpack.c.b16 %v324, %v323
    %v334 = vpack.c.b16 %v326, %v325
    %343 = vmatprep.subr.bf16.mxu0 0
    %344 = vmatpush1.bf16.msra.mxu0 %v327
    %345 = vmatprep.subr.bf16.mxu0 0
    %346 = vmatpush1.bf16.msra.mxu0 %v328
    %347 = vmatprep.subr.bf16.mxu0 0
    %348 = vmatpush1.bf16.msra.mxu0 %v329
    %349 = vmatprep.subr.bf16.mxu0 0
    %350 = vmatpush1.bf16.msra.mxu0 %v330
    %351 = vmatprep.subr.bf16.mxu0 0
    %352 = vmatpush1.bf16.msra.mxu0 %v331
    %353 = vmatprep.subr.bf16.mxu0 0
    %354 = vmatpush1.bf16.msra.mxu0 %v332
    %355 = vmatprep.subr.bf16.mxu0 0
    %356 = vmatpush1.bf16.msra.mxu0 %v333
    %357 = vmatprep.subr.bf16.mxu0 0
    %358 = vmatpush1.bf16.msra.mxu0 %v334
    %359 = vmatprep.subr.bf16.mxu0 0
    %360 = vmatpush1.bf16.msra.mxu0 0
    %361 = vmatprep.subr.bf16.mxu0 0
    %362 = vmatpush1.bf16.msra.mxu0 0
    %363 = vmatprep.subr.bf16.mxu0 0
    %364 = vmatpush1.bf16.msra.mxu0 0
    %365 = vmatprep.subr.bf16.mxu0 0
    %366 = vmatpush1.bf16.msra.mxu0 0
    %367 = vmatprep.subr.bf16.mxu0 0
    %368 = vmatpush1.bf16.msra.mxu0 0
    %369 = vmatprep.subr.bf16.mxu0 0
    %370 = vmatpush1.bf16.msra.mxu0 0
    %371 = vmatprep.subr.bf16.mxu0 0
    %372 = vmatpush1.bf16.msra.mxu0 0
    %373 = vmatprep.subr.bf16.mxu0 0
    %374 = vmatpush1.bf16.msra.mxu0 0
    %375 = vmatprep.mubr.bf16.mxu0 0
    %376 = vmatmul.mubr.bf16.gmra.mrb[0].mxu0 %v271
    %v377 = vpop.f32.mrb[0].mxu0
    %v378 = vadd.f32 %v293, %v377
    %v379 = vpop.f32.mrb[0].mxu0
    %v380 = vpop.f32.mrb[0].mxu0
    %v381 = vpop.f32.mrb[0].mxu0
    %382 = vdwg.mxu0
    %383 = vst [vmem:[#allocation2] sm:$0x3] %v378
    // Predicated region
    $region30: #{twostage_part_model.5} parent=1 // pred_check
      _
    $region31: #{twostage_part_model.5} parent=1 // pred_check_branch
      %385 = sbr.rel (0) target = $region33
    $region32: #{twostage_part_model.5} parent=1 // pred_region
      %s387 = ssub.s32 32, 32
      %388 = vsyncadd [#allocation3], %s387
      %s390 = sshll.u32 [#allocation2], 4
      %s391 = int_to_ptr.vmem [resolvable:$true] %s390
      %393 = dma.vmem_to_hbm [thread:$0]  %s391, 32, %s7, [#allocation3]
    $region33: #{twostage_part_model.5} parent=1 // pred_fallthru
      _
    // Predicated region
    $region34: #{twostage_part_model.5} parent=1 // pred_check
      _
    $region35: #{twostage_part_model.5} parent=1 // pred_check_branch
      %395 = sbr.rel (0) target = $region37
    $region36: #{twostage_part_model.5} parent=1 // pred_region
      %396 = dma.done [#allocation3], 32
    $region37: #{twostage_part_model.5} parent=1 // pred_fallthru
      _
    %397 = vsyncpa [#allocation3], 1

// kernel: twostage_part_model.3
$region0: #{twostage_part_model.3}
  #allocation0 [shape = 'u32[]', space=smem, size = 0x4, offset = 0x4, fixed_abs, tag = 'smem constant byte address 0x4 - core index']
  #allocation1 [shape = 'u32[144,128]{1,0:T(1,128)}', space=vmem, size = 0x12000, scoped, tag = 'internal scratch']
  %s0 = inlined_call_operand.vmem [shape: f32[128,36], index: 0, kind: input, shape index: {}]
  %s1 = inlined_call_operand.vmem [shape: bf16[36,128], index: 1, kind: input, shape index: {}]
  %s2 = inlined_call_operand.vmem [shape: f32[1,128], index: 2, kind: input, shape index: {}]
  %s3 = inlined_call_operand.vmem [shape: f32[1,128], index: 3, kind: input, shape index: {}]
  %s4 = inlined_call_operand.vmem [shape: f32[1,128], index: 4, kind: input, shape index: {}]
  %s5 = inlined_call_operand.vmem [shape: f32[128,128], index: 5, kind: output, shape index: {}]
  %s6 = sld [smem:[#allocation0]]
  $region30: #{twostage_part_model.3} parent=0
    _
  %s8 = ssub.s32 1, %s6
  %s9 = scalar_select 0, %s8, %s6
  // Predicated region
  $region2: #{twostage_part_model.3} parent=0 // pred_check
    _
  $region3: #{twostage_part_model.3} parent=0 // pred_check_branch
    %11 = sbr.rel (0) target = $region5
  $region4: #{twostage_part_model.3} parent=0 // pred_region
    _
  $region5: #{twostage_part_model.3} parent=0 // pred_fallthru
    _
  // Predicated region
  $region6: #{twostage_part_model.3} parent=0 // pred_check
    _
  $region7: #{twostage_part_model.3} parent=0 // pred_check_branch
    %13 = sbr.rel (0) target = $region9
  $region8: #{twostage_part_model.3} parent=0 // pred_region
    _
  $region9: #{twostage_part_model.3} parent=0 // pred_fallthru
    _
  // Predicated region
  $region10: #{twostage_part_model.3} parent=0 // pred_check
    _
  $region11: #{twostage_part_model.3} parent=0 // pred_check_branch
    %15 = sbr.rel (0) target = $region13
  $region12: #{twostage_part_model.3} parent=0 // pred_region
    _
  $region13: #{twostage_part_model.3} parent=0 // pred_fallthru
    _
  // Predicated region
  $region14: #{twostage_part_model.3} parent=0 // pred_check
    _
  $region15: #{twostage_part_model.3} parent=0 // pred_check_branch
    %17 = sbr.rel (0) target = $region17
  $region16: #{twostage_part_model.3} parent=0 // pred_region
    _
  $region17: #{twostage_part_model.3} parent=0 // pred_fallthru
    _
  // Predicated region
  $region18: #{twostage_part_model.3} parent=0 // pred_check
    _
  $region19: #{twostage_part_model.3} parent=0 // pred_check_branch
    %19 = sbr.rel (0) target = $region21
  $region20: #{twostage_part_model.3} parent=0 // pred_region
    _
  $region21: #{twostage_part_model.3} parent=0 // pred_fallthru
    _
  %v21 = vld [vmem:[%s0] sm:$0xff]
  %v22 = vld [vmem:[%s0 + $0x8] sm:$0xff]
  %v23 = vld [vmem:[%s0 + $0x10] sm:$0xff]
  %v24 = vld [vmem:[%s0 + $0x18] sm:$0xff]
  %v25 = vld [vmem:[%s0 + $0x20] sm:$0xff]
  %v26 = vld [vmem:[%s0 + $0x28] sm:$0xff]
  %v27 = vld [vmem:[%s0 + $0x30] sm:$0xff]
  %v28 = vld [vmem:[%s0 + $0x38] sm:$0xff]
  %v29 = vld [vmem:[%s0 + $0x40] sm:$0xff]
  %v30 = vld [vmem:[%s0 + $0x48] sm:$0xff]
  %v31 = vld [vmem:[%s0 + $0x50] sm:$0xff]
  %v32 = vld [vmem:[%s0 + $0x58] sm:$0xff]
  %v33 = vld [vmem:[%s0 + $0x60] sm:$0xff]
  %v34 = vld [vmem:[%s0 + $0x68] sm:$0xff]
  %v35 = vld [vmem:[%s0 + $0x70] sm:$0xff]
  %v36 = vld [vmem:[%s0 + $0x78] sm:$0xff]
  %v37 = vpack.c.bf16 %v22, %v21
  %v38 = vpack.c.bf16 %v24, %v23
  %v39 = vpack.c.bf16 %v26, %v25
  %v40 = vpack.c.bf16 %v28, %v27
  %v41 = vpack.c.bf16 %v30, %v29
  %v42 = vpack.c.bf16 %v32, %v31
  %v43 = vpack.c.bf16 %v34, %v33
  %v44 = vpack.c.bf16 %v36, %v35
  %v45 = vld [vmem:[%s1] sm:$0xf]
  %v46 = vld [vmem:[%s1 + $0x4] sm:$0xf]
  %v47 = vld [vmem:[%s1 + $0x8] sm:$0xf]
  %v48 = vld [vmem:[%s1 + $0xc] sm:$0xf]
  %v49 = vld [vmem:[%s1 + $0x10] sm:$0x3]
  %v50 = vld [vmem:[%s2] sm:$0x1]
  %v52 = vlaneseq
  %v53 = vshrl.u32 %v52, 7
  %v54 = vsub.s32 0, %v53
  %v55 = vrot.slane %v50, %v54
  %v62 = vunpack.c.l.b16 %v45
  %v63 = vunpack.c.l.b16 %v46
  %v64 = vunpack.c.l.b16 %v47
  %v65 = vunpack.c.l.b16 %v48
  %v66 = vunpack.c.l.b16 %v49
  %v67 = vpack.c.b16 %v63, %v62
  %v68 = vpack.c.b16 %v65, %v64
  %v69 = vpack.c.b16 %v66, %v66
  %vm72 = vcmask 293888
  %v74 = vsel %vm72, %v37, 0
  %v77 = vsel %vm72, %v38, 0
  %v80 = vsel %vm72, %v39, 0
  %v83 = vsel %vm72, %v40, 0
  %v86 = vsel %vm72, %v41, 0
  %v89 = vsel %vm72, %v42, 0
  %v92 = vsel %vm72, %v43, 0
  %v95 = vsel %vm72, %v44, 0
  %vm97 = vcmask 1041408
  %v99 = vsel %vm97, %v69, 0
  %101 = vmatprep.subr.bf16.mxu0 0
  %102 = vmatpush1.bf16.msra.mxu0 %v67
  %103 = vmatprep.subr.bf16.mxu0 0
  %104 = vmatpush1.bf16.msra.mxu0 %v68
  %105 = vmatprep.subr.bf16.mxu0 0
  %106 = vmatpush1.bf16.msra.mxu0 %v99
  %107 = vmatprep.subr.bf16.mxu0 0
  %108 = vmatpush1.bf16.msra.mxu0 0
  %109 = vmatprep.subr.bf16.mxu0 0
  %110 = vmatpush1.bf16.msra.mxu0 0
  %111 = vmatprep.subr.bf16.mxu0 0
  %112 = vmatpush1.bf16.msra.mxu0 0
  %113 = vmatprep.subr.bf16.mxu0 0
  %114 = vmatpush1.bf16.msra.mxu0 0
  %115 = vmatprep.subr.bf16.mxu0 0
  %116 = vmatpush1.bf16.msra.mxu0 0
  %117 = vmatprep.subr.bf16.mxu0 0
  %118 = vmatpush1.bf16.msra.mxu0 0
  %119 = vmatprep.subr.bf16.mxu0 0
  %120 = vmatpush1.bf16.msra.mxu0 0
  %121 = vmatprep.subr.bf16.mxu0 0
  %122 = vmatpush1.bf16.msra.mxu0 0
  %123 = vmatprep.subr.bf16.mxu0 0
  %124 = vmatpush1.bf16.msra.mxu0 0
  %125 = vmatprep.subr.bf16.mxu0 0
  %126 = vmatpush1.bf16.msra.mxu0 0
  %127 = vmatprep.subr.bf16.mxu0 0
  %128 = vmatpush1.bf16.msra.mxu0 0
  %129 = vmatprep.subr.bf16.mxu0 0
  %130 = vmatpush1.bf16.msra.mxu0 0
  %131 = vmatprep.subr.bf16.mxu0 0
  %132 = vmatpush1.bf16.msra.mxu0 0
  %133 = vmatprep.mubr.bf16.mxu0 0
  %134 = vmatmul.mubr.bf16.gmra.mrb[0].mxu0 %v74
  %v135 = vpop.f32.mrb[0].mxu0
  %v136 = vadd.f32 %v55, %v135
  %v137 = vpop.f32.mrb[0].mxu0
  %v138 = vpop.f32.mrb[0].mxu0
  %v139 = vadd.f32 %v55, %v138
  %v140 = vpop.f32.mrb[0].mxu0
  %141 = vmatprep.mubr.bf16.mxu0 0
  %142 = vmatmul.mubr.bf16.gmra.mrb[0].mxu0 %v77
  %v143 = vpop.f32.mrb[0].mxu0
  %v144 = vadd.f32 %v55, %v143
  %v145 = vpop.f32.mrb[0].mxu0
  %v146 = vpop.f32.mrb[0].mxu0
  %v147 = vadd.f32 %v55, %v146
  %v148 = vpop.f32.mrb[0].mxu0
  %149 = vmatprep.mubr.bf16.mxu0 0
  %150 = vmatmul.mubr.bf16.gmra.mrb[0].mxu0 %v80
  %v151 = vpop.f32.mrb[0].mxu0
  %v152 = vadd.f32 %v55, %v151
  %v153 = vpop.f32.mrb[0].mxu0
  %v154 = vpop.f32.mrb[0].mxu0
  %v155 = vadd.f32 %v55, %v154
  %v156 = vpop.f32.mrb[0].mxu0
  %157 = vmatprep.mubr.bf16.mxu0 0
  %158 = vmatmul.mubr.bf16.gmra.mrb[0].mxu0 %v83
  %v159 = vpop.f32.mrb[0].mxu0
  %v160 = vadd.f32 %v55, %v159
  %v161 = vpop.f32.mrb[0].mxu0
  %v162 = vpop.f32.mrb[0].mxu0
  %v163 = vadd.f32 %v55, %v162
  %v164 = vpop.f32.mrb[0].mxu0
  %165 = vmatprep.mubr.bf16.mxu0 0
  %166 = vmatmul.mubr.bf16.gmra.mrb[0].mxu0 %v86
  %v167 = vpop.f32.mrb[0].mxu0
  %v168 = vadd.f32 %v55, %v167
  %v169 = vpop.f32.mrb[0].mxu0
  %v170 = vpop.f32.mrb[0].mxu0
  %v171 = vadd.f32 %v55, %v170
  %v172 = vpop.f32.mrb[0].mxu0
  %173 = vmatprep.mubr.bf16.mxu0 0
  %174 = vmatmul.mubr.bf16.gmra.mrb[0].mxu0 %v89
  %v175 = vpop.f32.mrb[0].mxu0
  %v176 = vadd.f32 %v55, %v175
  %v177 = vpop.f32.mrb[0].mxu0
  %v178 = vpop.f32.mrb[0].mxu0
  %v179 = vadd.f32 %v55, %v178
  %v180 = vpop.f32.mrb[0].mxu0
  %181 = vmatprep.mubr.bf16.mxu0 0
  %182 = vmatmul.mubr.bf16.gmra.mrb[0].mxu0 %v92
  %v183 = vpop.f32.mrb[0].mxu0
  %v184 = vadd.f32 %v55, %v183
  %v185 = vpop.f32.mrb[0].mxu0
  %v186 = vpop.f32.mrb[0].mxu0
  %v187 = vadd.f32 %v55, %v186
  %v188 = vpop.f32.mrb[0].mxu0
  %189 = vmatprep.mubr.bf16.mxu0 0
  %190 = vmatmul.mubr.bf16.gmra.mrb[0].mxu0 %v95
  %v191 = vpop.f32.mrb[0].mxu0
  %v192 = vadd.f32 %v55, %v191
  %v193 = vpop.f32.mrb[0].mxu0
  %v194 = vpop.f32.mrb[0].mxu0
  %v195 = vadd.f32 %v55, %v194
  %v196 = vpop.f32.mrb[0].mxu0
  %197 = vdwg.mxu0
  %v198 = vmul.f32 %v136, 0.5
  %v199 = vmul.f32 %v139, 0.5
  %v200 = vmul.f32 %v144, 0.5
  %v201 = vmul.f32 %v147, 0.5
  %v202 = vmul.f32 %v152, 0.5
  %v203 = vmul.f32 %v155, 0.5
  %v204 = vmul.f32 %v160, 0.5
  %v205 = vmul.f32 %v163, 0.5
  %v206 = vmul.f32 %v168, 0.5
  %v207 = vmul.f32 %v171, 0.5
  %v208 = vmul.f32 %v176, 0.5
  %v209 = vmul.f32 %v179, 0.5
  %v210 = vmul.f32 %v184, 0.5
  %v211 = vmul.f32 %v187, 0.5
  %v212 = vmul.f32 %v192, 0.5
  %v213 = vmul.f32 %v195, 0.5
  %v214 = vmul.f32 %v136, 0.044715
  %v215 = vmul.f32 %v139, 0.044715
  %v216 = vmul.f32 %v144, 0.044715
  %v217 = vmul.f32 %v147, 0.044715
  %v218 = vmul.f32 %v152, 0.044715
  %v219 = vmul.f32 %v155, 0.044715
  %v220 = vmul.f32 %v160, 0.044715
  %v221 = vmul.f32 %v163, 0.044715
  %v222 = vmul.f32 %v168, 0.044715
  %v223 = vmul.f32 %v171, 0.044715
  %v224 = vmul.f32 %v176, 0.044715
  %v225 = vmul.f32 %v179, 0.044715
  %v226 = vmul.f32 %v184, 0.044715
  %v227 = vmul.f32 %v187, 0.044715
  %v228 = vmul.f32 %v192, 0.044715
  %v229 = vmul.f32 %v195, 0.044715
  %v230 = vmul.f32 %v214, %v136
  %v231 = vmul.f32 %v215, %v139
  %v232 = vmul.f32 %v216, %v144
  %v233 = vmul.f32 %v217, %v147
  %v234 = vmul.f32 %v218, %v152
  %v235 = vmul.f32 %v219, %v155
  %v236 = vmul.f32 %v220, %v160
  %v237 = vmul.f32 %v221, %v163
  %v238 = vmul.f32 %v222, %v168
  %v239 = vmul.f32 %v223, %v171
  %v240 = vmul.f32 %v224, %v176
  %v241 = vmul.f32 %v225, %v179
  %v242 = vmul.f32 %v226, %v184
  %v243 = vmul.f32 %v227, %v187
  %v244 = vmul.f32 %v228, %v192
  %v245 = vmul.f32 %v229, %v195
  %v246 = vmul.f32 %v230, %v136
  %v247 = vmul.f32 %v231, %v139
  %v248 = vmul.f32 %v232, %v144
  %v249 = vmul.f32 %v233, %v147
  %v250 = vmul.f32 %v234, %v152
  %v251 = vmul.f32 %v235, %v155
  %v252 = vmul.f32 %v236, %v160
  %v253 = vmul.f32 %v237, %v163
  %v254 = vmul.f32 %v238, %v168
  %v255 = vmul.f32 %v239, %v171
  %v256 = vmul.f32 %v240, %v176
  %v257 = vmul.f32 %v241, %v179
  %v258 = vmul.f32 %v242, %v184
  %v259 = vmul.f32 %v243, %v187
  %v260 = vmul.f32 %v244, %v192
  %v261 = vmul.f32 %v245, %v195
  %v262 = vadd.f32 %v136, %v246
  %v263 = vadd.f32 %v139, %v247
  %v264 = vadd.f32 %v144, %v248
  %v265 = vadd.f32 %v147, %v249
  %v266 = vadd.f32 %v152, %v250
  %v267 = vadd.f32 %v155, %v251
  %v268 = vadd.f32 %v160, %v252
  %v269 = vadd.f32 %v163, %v253
  %v270 = vadd.f32 %v168, %v254
  %v271 = vadd.f32 %v171, %v255
  %v272 = vadd.f32 %v176, %v256
  %v273 = vadd.f32 %v179, %v257
  %v274 = vadd.f32 %v184, %v258
  %v275 = vadd.f32 %v187, %v259
  %v276 = vadd.f32 %v192, %v260
  %v277 = vadd.f32 %v195, %v261
  %v278 = vmul.f32 %v262, 0.7978846
  %v279 = vmul.f32 %v263, 0.7978846
  %v280 = vmul.f32 %v264, 0.7978846
  %v281 = vmul.f32 %v265, 0.7978846
  %v282 = vmul.f32 %v266, 0.7978846
  %v283 = vmul.f32 %v267, 0.7978846
  %v284 = vmul.f32 %v268, 0.7978846
  %v285 = vmul.f32 %v269, 0.7978846
  %v286 = vmul.f32 %v270, 0.7978846
  %v287 = vmul.f32 %v271, 0.7978846
  %v288 = vmul.f32 %v272, 0.7978846
  %v289 = vmul.f32 %v273, 0.7978846
  %v290 = vmul.f32 %v274, 0.7978846
  %v291 = vmul.f32 %v275, 0.7978846
  %v292 = vmul.f32 %v276, 0.7978846
  %v293 = vmul.f32 %v277, 0.7978846
  %v294 = vtanh.pop %v278
  %v295 = vtanh.pop %v279
  %v296 = vtanh.pop %v280
  %v297 = vtanh.pop %v281
  %v298 = vtanh.pop %v282
  %v299 = vtanh.pop %v283
  %v300 = vtanh.pop %v284
  %v301 = vtanh.pop %v285
  %v302 = vtanh.pop %v286
  %v303 = vtanh.pop %v287
  %v304 = vtanh.pop %v288
  %v305 = vtanh.pop %v289
  %v306 = vtanh.pop %v290
  %v307 = vtanh.pop %v291
  %v308 = vtanh.pop %v292
  %v309 = vtanh.pop %v293
  %v310 = vadd.f32 %v294, 1.0
  %v311 = vadd.f32 %v295, 1.0
  %v312 = vadd.f32 %v296, 1.0
  %v313 = vadd.f32 %v297, 1.0
  %v314 = vadd.f32 %v298, 1.0
  %v315 = vadd.f32 %v299, 1.0
  %v316 = vadd.f32 %v300, 1.0
  %v317 = vadd.f32 %v301, 1.0
  %v318 = vadd.f32 %v302, 1.0
  %v319 = vadd.f32 %v303, 1.0
  %v320 = vadd.f32 %v304, 1.0
  %v321 = vadd.f32 %v305, 1.0
  %v322 = vadd.f32 %v306, 1.0
  %v323 = vadd.f32 %v307, 1.0
  %v324 = vadd.f32 %v308, 1.0
  %v325 = vadd.f32 %v309, 1.0
  %v326 = vmul.f32 %v198, %v310
  %v327 = vmul.f32 %v199, %v311
  %v328 = vmul.f32 %v200, %v312
  %v329 = vmul.f32 %v201, %v313
  %v330 = vmul.f32 %v202, %v314
  %v331 = vmul.f32 %v203, %v315
  %v332 = vmul.f32 %v204, %v316
  %v333 = vmul.f32 %v205, %v317
  %v334 = vmul.f32 %v206, %v318
  %v335 = vmul.f32 %v207, %v319
  %v336 = vmul.f32 %v208, %v320
  %v337 = vmul.f32 %v209, %v321
  %v338 = vmul.f32 %v210, %v322
  %v339 = vmul.f32 %v211, %v323
  %v340 = vmul.f32 %v212, %v324
  %v341 = vmul.f32 %v213, %v325
  %v342 = vld [vmem:[%s3] sm:$0x1]
  %v344 = vlaneseq
  %v345 = vshrl.u32 %v344, 7
  %v346 = vsub.s32 0, %v345
  %v347 = vrot.slane %v342, %v346
  %v349 = vmul.f32 %v326, %v347
  %v350 = vmul.f32 %v327, %v347
  %v351 = vmul.f32 %v328, %v347
  %v352 = vmul.f32 %v329, %v347
  %v353 = vmul.f32 %v330, %v347
  %v354 = vmul.f32 %v331, %v347
  %v355 = vmul.f32 %v332, %v347
  %v356 = vmul.f32 %v333, %v347
  %v357 = vmul.f32 %v334, %v347
  %v358 = vmul.f32 %v335, %v347
  %v359 = vmul.f32 %v336, %v347
  %v360 = vmul.f32 %v337, %v347
  %v361 = vmul.f32 %v338, %v347
  %v362 = vmul.f32 %v339, %v347
  %v363 = vmul.f32 %v340, %v347
  %v364 = vmul.f32 %v341, %v347
  %v365 = vld [vmem:[%s4] sm:$0x1]
  %v367 = vlaneseq
  %v368 = vshrl.u32 %v367, 7
  %v369 = vsub.s32 0, %v368
  %v370 = vrot.slane %v365, %v369
  %v372 = vadd.f32 %v349, %v370
  %v373 = vadd.f32 %v350, %v370
  %v374 = vadd.f32 %v351, %v370
  %v375 = vadd.f32 %v352, %v370
  %v376 = vadd.f32 %v353, %v370
  %v377 = vadd.f32 %v354, %v370
  %v378 = vadd.f32 %v355, %v370
  %v379 = vadd.f32 %v356, %v370
  %v380 = vadd.f32 %v357, %v370
  %v381 = vadd.f32 %v358, %v370
  %v382 = vadd.f32 %v359, %v370
  %v383 = vadd.f32 %v360, %v370
  %v384 = vadd.f32 %v361, %v370
  %v385 = vadd.f32 %v362, %v370
  %v386 = vadd.f32 %v363, %v370
  %v387 = vadd.f32 %v364, %v370
  %388 = vst [vmem:[%s5] sm:$0xff] %v372
  %389 = vst [vmem:[%s5 + $0x8] sm:$0xff] %v373
  %390 = vst [vmem:[%s5 + $0x10] sm:$0xff] %v374
  %391 = vst [vmem:[%s5 + $0x18] sm:$0xff] %v375
  %392 = vst [vmem:[%s5 + $0x20] sm:$0xff] %v376
  %393 = vst [vmem:[%s5 + $0x28] sm:$0xff] %v377
  %394 = vst [vmem:[%s5 + $0x30] sm:$0xff] %v378
  %395 = vst [vmem:[%s5 + $0x38] sm:$0xff] %v379
  %396 = vst [vmem:[%s5 + $0x40] sm:$0xff] %v380
  %397 = vst [vmem:[%s5 + $0x48] sm:$0xff] %v381
  %398 = vst [vmem:[%s5 + $0x50] sm:$0xff] %v382
  %399 = vst [vmem:[%s5 + $0x58] sm:$0xff] %v383
  %400 = vst [vmem:[%s5 + $0x60] sm:$0xff] %v384
  %401 = vst [vmem:[%s5 + $0x68] sm:$0xff] %v385
  %402 = vst [vmem:[%s5 + $0x70] sm:$0xff] %v386
  %403 = vst [vmem:[%s5 + $0x78] sm:$0xff] %v387
  // Predicated region
  $region22: #{twostage_part_model.3} parent=0 // pred_check
    _
  $region23: #{twostage_part_model.3} parent=0 // pred_check_branch
    %405 = sbr.rel (0) target = $region25
  $region24: #{twostage_part_model.3} parent=0 // pred_region
    _
  $region25: #{twostage_part_model.3} parent=0 // pred_fallthru
    _
  // Predicated region
  $region26: #{twostage_part_model.3} parent=0 // pred_check
    _
  $region27: #{twostage_part_model.3} parent=0 // pred_check_branch
    %407 = sbr.rel (0) target = $region29
  $region28: #{twostage_part_model.3} parent=0 // pred_region
    _
  $region29: #{twostage_part_model.3} parent=0 // pred_fallthru
    _

// kernel: twostage_part_model.4
$region0: #{twostage_part_model.4}
  #allocation0 [shape = 'u32[]', space=smem, size = 0x4, offset = 0x4, fixed_abs, tag = 'smem constant byte address 0x4 - core index']
  #allocation1 [shape = 'u32[144,128]{1,0:T(1,128)}', space=vmem, size = 0x12000, scoped, tag = 'internal scratch']
  %s0 = inlined_call_operand.vmem [shape: f32[2,10,10,128], index: 0, kind: input, shape index: {}]
  %s1 = inlined_call_operand.vmem [shape: f32[9,128], index: 1, kind: input, shape index: {}]
  %s2 = inlined_call_operand.vmem [shape: bf16[128,128], index: 2, kind: input, shape index: {}]
  %s3 = inlined_call_operand.vmem [shape: f32[16,64], index: 3, kind: input, shape index: {}]
  %s4 = inlined_call_operand.hbm [shape: f32[128,128], index: 4, kind: output, shape index: {0}]
  %s5 = inlined_call_operand.vmem [shape: f32[32,128], index: 5, kind: output, shape index: {1}]
  %6 = xla_tuple %s4, %s5
  %s7 = sld [smem:[#allocation0]]
  $region57: #{twostage_part_model.4} parent=0
    _
  %s9 = ssub.s32 1, %s7
  %s10 = scalar_select 0, %s9, %s7
  $region1: #{twostage_part_model.4} parent=0
    #allocation2 [shape = 'u8[65536]{0}', space=vmem, size = 0x10000, scoped, tag = 'output window, operand 0']
    #allocation3 [shape = 's32[2]{0}', space=sflag, size = 0x8, scoped, tag = 'scoped memory for twostage_part_model.4']
    %11 = vsyncpa [#allocation3], 0
    %s12 = scalar_lea.sflag [#allocation3], 1
    %13 = vsyncpa %s12, 0
    loop: start=0, step=1, limit=4
    $region2: #{twostage_part_model.4} parent=1 // loop_pre_header
      _
    $region3: #{twostage_part_model.4} parent=1 // loop_header
      %s15 = sphi 0, %s19
      %p16 = scmp.ge.s32.totalorder %s15, 4
      %s25 = sphi 0, %s27
      %s28 = sphi 0, %s25
      %s29 = sphi 0, %s28
      %s45 = sphi 0, %s29
      %s49 = sphi 0, %s49
      %s51 = sphi 0, %s49
      %s52 = sphi 0, %s51
      %s66 = sphi 0, %s52
      %s70 = sphi 0, %s70
      %s72 = sphi 0, %s70
      %s73 = sphi 0, %s72
      %s87 = sphi 0, %s73
      %s91 = sphi 0, %s91
      %s93 = sphi 0, %s91
      %s94 = sphi 0, %s93
      %s108 = sphi 0, %s94
      %s114 = sphi 0, %s116
      %s117 = sphi 0, %s114
      %s118 = sphi 0, %s117
      %s134 = sphi 0, %s118
      %s140 = sphi 0, %s142
      %s143 = sphi 0, %s140
      %s144 = sphi 0, %s143
      %s160 = sphi 0, %s144
    $region4: #{twostage_part_model.4} parent=1 // loop_header_branch
      %18 = sbr.rel (%p16) target = $region8
    $region5: #{twostage_part_model.4} parent=1 // loop_body
      %s20 = ssub.s32 %s15, 1
      %s21 = ssub.s32 %s15, 2
      %s22 = sadd.s32 %s15, 1
      %s23 = ssub.s32 %s15, %s22
      %p24 = scmp.eq.s32.totalorder %s23, 0
      %s26 = sadd.s32 %s25, 1
      %s27 = scalar_select %p24, %s25, %s26
      %p30 = pneg %p24
      %p31 = scmp.eq.s32.totalorder %s15, 1
      %p32 = por %p30, %p31
      %p33 = scmp.ne.s32.totalorder %s25, %s28
      %p34 = scmp.eq.s32.totalorder %s15, 0
      %p35 = por %p33, %p34
      %p36 = scmp.ne.s32.totalorder %s25, %s28
      %p37 = scmp.eq.s32.totalorder %s20, 1
      %p38 = por %p36, %p37
      %p39 = scmp.ne.s32.totalorder %s28, %s29
      %p40 = scmp.eq.s32.totalorder %s20, 0
      %p41 = por %p39, %p40
      %p42 = scmp.ne.s32.totalorder %s28, %s29
      %p43 = scmp.eq.s32.totalorder %s21, 1
      %p44 = por %p42, %p43
      %p46 = scmp.ne.s32.totalorder %s29, %s45
      %p47 = scmp.eq.s32.totalorder %s21, 0
      %p48 = por %p46, %p47
      %s50 = sadd.s32 %s49, 1
      %p53 = scmp.eq.s32.totalorder %s15, 1
      %p54 = scmp.ne.s32.totalorder %s49, %s51
      %p55 = scmp.eq.s32.totalorder %s15, 0
      %p56 = por %p54, %p55
      %p57 = scmp.ne.s32.totalorder %s49, %s51
      %p58 = scmp.eq.s32.totalorder %s20, 1
      %p59 = por %p57, %p58
      %p60 = scmp.ne.s32.totalorder %s51, %s52
      %p61 = scmp.eq.s32.totalorder %s20, 0
      %p62 = por %p60, %p61
      %p63 = scmp.ne.s32.totalorder %s51, %s52
      %p64 = scmp.eq.s32.totalorder %s21, 1
      %p65 = por %p63, %p64
      %p67 = scmp.ne.s32.totalorder %s52, %s66
      %p68 = scmp.eq.s32.totalorder %s21, 0
      %p69 = por %p67, %p68
      %s71 = sadd.s32 %s70, 1
      %p74 = scmp.eq.s32.totalorder %s15, 1
      %p75 = scmp.ne.s32.totalorder %s70, %s72
      %p76 = scmp.eq.s32.totalorder %s15, 0
      %p77 = por %p75, %p76
      %p78 = scmp.ne.s32.totalorder %s70, %s72
      %p79 = scmp.eq.s32.totalorder %s20, 1
      %p80 = por %p78, %p79
      %p81 = scmp.ne.s32.totalorder %s72, %s73
      %p82 = scmp.eq.s32.totalorder %s20, 0
      %p83 = por %p81, %p82
      %p84 = scmp.ne.s32.totalorder %s72, %s73
      %p85 = scmp.eq.s32.totalorder %s21, 1
      %p86 = por %p84, %p85
      %p88 = scmp.ne.s32.totalorder %s73, %s87
      %p89 = scmp.eq.s32.totalorder %s21, 0
      %p90 = por %p88, %p89
      %s92 = sadd.s32 %s91, 1
      %p95 = scmp.eq.s32.totalorder %s15, 1
      %p96 = scmp.ne.s32.totalorder %s91, %s93
      %p97 = scmp.eq.s32.totalorder %s15, 0
      %p98 = por %p96, %p97
      %p99 = scmp.ne.s32.totalorder %s91, %s93
      %p100 = scmp.eq.s32.totalorder %s20, 1
      %p101 = por %p99, %p100
      %p102 = scmp.ne.s32.totalorder %s93, %s94
      %p103 = scmp.eq.s32.totalorder %s20, 0
      %p104 = por %p102, %p103
      %p105 = scmp.ne.s32.totalorder %s93, %s94
      %p106 = scmp.eq.s32.totalorder %s21, 1
      %p107 = por %p105, %p106
      %p109 = scmp.ne.s32.totalorder %s94, %s108
      %p110 = scmp.eq.s32.totalorder %s21, 0
      %p111 = por %p109, %p110
      %s112 = ssub.s32 %s15, %s22
      %p113 = scmp.eq.s32.totalorder %s112, 0
      %s115 = sadd.s32 %s114, 1
      %s116 = scalar_select %p113, %s114, %s115
      %p119 = pneg %p113
      %p120 = scmp.eq.s32.totalorder %s15, 1
      %p121 = por %p119, %p120
      %p122 = scmp.ne.s32.totalorder %s114, %s117
      %p123 = scmp.eq.s32.totalorder %s15, 0
      %p124 = por %p122, %p123
      %p125 = scmp.ne.s32.totalorder %s114, %s117
      %p126 = scmp.eq.s32.totalorder %s20, 1
      %p127 = por %p125, %p126
      %p128 = scmp.ne.s32.totalorder %s117, %s118
      %p129 = scmp.eq.s32.totalorder %s20, 0
      %p130 = por %p128, %p129
      %p131 = scmp.ne.s32.totalorder %s117, %s118
      %p132 = scmp.eq.s32.totalorder %s21, 1
      %p133 = por %p131, %p132
      %p135 = scmp.ne.s32.totalorder %s118, %s134
      %p136 = scmp.eq.s32.totalorder %s21, 0
      %p137 = por %p135, %p136
      %s138 = ssub.s32 %s15, %s22
      %p139 = scmp.eq.s32.totalorder %s138, 0
      %s141 = sadd.s32 %s140, 1
      %s142 = scalar_select %p139, %s140, %s141
      %p145 = pneg %p139
      %p146 = scmp.eq.s32.totalorder %s15, 1
      %p147 = por %p145, %p146
      %p148 = scmp.ne.s32.totalorder %s140, %s143
      %p149 = scmp.eq.s32.totalorder %s15, 0
      %p150 = por %p148, %p149
      %p151 = scmp.ne.s32.totalorder %s140, %s143
      %p152 = scmp.eq.s32.totalorder %s20, 1
      %p153 = por %p151, %p152
      %p154 = scmp.ne.s32.totalorder %s143, %s144
      %p155 = scmp.eq.s32.totalorder %s20, 0
      %p156 = por %p154, %p155
      %p157 = scmp.ne.s32.totalorder %s143, %s144
      %p158 = scmp.eq.s32.totalorder %s21, 1
      %p159 = por %p157, %p158
      %p161 = scmp.ne.s32.totalorder %s144, %s160
      %p162 = scmp.eq.s32.totalorder %s21, 0
      %p163 = por %p161, %p162
      %p164 = scmp.le.s32.totalorder 1, %s15
      %p165 = scmp.lt.s32.totalorder %s15, 3
      %p166 = pnand %p164, %p165
      %p167 = pneg %p166
      // Predicated region
      $region9: #{twostage_part_model.4} parent=5 // pred_check
        _
      $region10: #{twostage_part_model.4} parent=5 // pred_check_branch
        %169 = sbr.rel (%p166) target = $region12
      $region11: #{twostage_part_model.4} parent=5 // pred_region
        %s170 = ssub.s32 %s15, 1
        // Predicated region
        $region13: #{twostage_part_model.4} parent=11 // pred_check
          %p171 = pneg %p62
        $region14: #{twostage_part_model.4} parent=11 // pred_check_branch
          %173 = sbr.rel (%p171) target = $region16
        $region15: #{twostage_part_model.4} parent=11 // pred_region
          _
        $region16: #{twostage_part_model.4} parent=11 // pred_fallthru
          _
        // Predicated region
        $region17: #{twostage_part_model.4} parent=11 // pred_check
          %p174 = pneg %p83
        $region18: #{twostage_part_model.4} parent=11 // pred_check_branch
          %176 = sbr.rel (%p174) target = $region20
        $region19: #{twostage_part_model.4} parent=11 // pred_region
          _
        $region20: #{twostage_part_model.4} parent=11 // pred_fallthru
          _
        // Predicated region
        $region21: #{twostage_part_model.4} parent=11 // pred_check
          %p177 = pneg %p104
        $region22: #{twostage_part_model.4} parent=11 // pred_check_branch
          %179 = sbr.rel (%p177) target = $region24
        $region23: #{twostage_part_model.4} parent=11 // pred_region
          _
        $region24: #{twostage_part_model.4} parent=11 // pred_fallthru
          _
      $region12: #{twostage_part_model.4} parent=5 // pred_fallthru
        _
      %p180 = scmp.lt.s32.totalorder %s15, 2
      // Predicated region
      $region25: #{twostage_part_model.4} parent=5 // pred_check
        %p181 = pneg %p180
      $region26: #{twostage_part_model.4} parent=5 // pred_check_branch
        %183 = sbr.rel (%p181) target = $region28
      $region27: #{twostage_part_model.4} parent=5 // pred_region
        // Predicated region
        $region29: #{twostage_part_model.4} parent=27 // pred_check
          %p184 = pneg %p35
        $region30: #{twostage_part_model.4} parent=27 // pred_check_branch
          %186 = sbr.rel (%p184) target = $region32
        $region31: #{twostage_part_model.4} parent=27 // pred_region
          %p187 = scmp.lt.s32.totalorder %s15, 1
          %s188 = scalar_select %p187, %s15, 1
          %s189 = smul.addr %s188, 20
          %s190 = smul.addr %s189, 8
          %s191 = scalar_lea.vmem %s0, %s190
        $region32: #{twostage_part_model.4} parent=27 // pred_fallthru
          _
      $region28: #{twostage_part_model.4} parent=5 // pred_fallthru
        _
      %p192 = scmp.le.s32.totalorder 1, %s15
      %p193 = scmp.lt.s32.totalorder %s15, 3
      %p194 = pnand %p192, %p193
      %p195 = pneg %p194
      // Predicated region
      $region33: #{twostage_part_model.4} parent=5 // pred_check
        _
      $region34: #{twostage_part_model.4} parent=5 // pred_check_branch
        %197 = sbr.rel (%p194) target = $region36
      $region35: #{twostage_part_model.4} parent=5 // pred_region
        %s198 = ssub.s32 %s15, 1
        %p199 = scmp.lt.s32.totalorder %s20, 1
        %s200 = scalar_select %p199, %s20, 1
        %s201 = smul.addr %s200, 20
        %s202 = smul.addr %s201, 8
        %s203 = scalar_lea.vmem %s0, %s202
        %p204 = pneg %p41
        %p205 = pneg %p38
        %p206 = pneg %p62
        %p207 = pneg %p59
        %p208 = pneg %p83
        %p209 = pneg %p80
        %p210 = pneg %p104
        %p211 = pneg %p101
        %p212 = pneg %p130
        %p213 = pneg %p127
        %s214 = sand.u32 %s117, 1
        %s215 = scalar_lea.sflag [#allocation3], %s214
        %s216 = sand.u32 %s117, 1
        %s217 = smul.addr %s216, 64
        %s218 = scalar_lea.vmem [#allocation2], %s217
        %p219 = pneg %p156
        %p220 = pneg %p153
        %s221 = smul.u32 2, %s20
        %p222 = scmp.lt.s32.totalorder %s221, 3
        %s223 = scalar_select %p222, %s221, 3
        %s224 = smul.addr %s223, 8
        %s225 = scalar_lea.vmem %s5, %s224
        %p226 = scmp.lt.s32.totalorder %s20, 1
        %s227 = scalar_select %p226, %s20, 1
        %s228 = smul.addr %s227, 20
        %s229 = smul.addr %s228, 8
        %s230 = scalar_lea.vmem %s0, %s229
        %s231 = smul.u32 8, %s20
        %s232 = smul.u32 2, %s20
        %p233 = scmp.lt.s32.totalorder %s232, 3
        %s234 = scalar_select %p233, %s232, 3
        %s235 = smul.addr %s234, 8
        %s236 = scalar_lea.vmem %s5, %s235
        %s237 = smul.u32 2, %s20
        %v239 = vld [vmem:[%s230] sm:$0xff]
        %v240 = vld [vmem:[%s230 + $0x10] sm:$0xff]
        %v241 = vld [vmem:[%s230 + $0x20] sm:$0xff]
        %v242 = vld [vmem:[%s230 + $0x30] sm:$0xff]
        %v243 = vld [vmem:[%s230 + $0x40] sm:$0xff]
        %v244 = vld [vmem:[%s230 + $0x50] sm:$0xff]
        %v245 = vld [vmem:[%s230 + $0x60] sm:$0xff]
        %v246 = vld [vmem:[%s230 + $0x70] sm:$0xff]
        %v247 = vld [vmem:[%s1] sm:$0x1]
        %v248 = vlaneseq
        %v249 = vshrl.u32 %v248, 7
        %v250 = vsub.s32 0, %v249
        %v251 = vrot.slane %v247, %v250
        %v252 = vmul.f32 %v239, %v251
        %v253 = vmul.f32 %v240, %v251
        %v254 = vmul.f32 %v241, %v251
        %v255 = vmul.f32 %v242, %v251
        %v256 = vmul.f32 %v243, %v251
        %v257 = vmul.f32 %v244, %v251
        %v258 = vmul.f32 %v245, %v251
        %v259 = vmul.f32 %v246, %v251
        %v260 = vadd.f32 %v252, 0.0
        %v261 = vadd.f32 %v253, 0.0
        %v262 = vadd.f32 %v254, 0.0
        %v263 = vadd.f32 %v255, 0.0
        %v264 = vadd.f32 %v256, 0.0
        %v265 = vadd.f32 %v257, 0.0
        %v266 = vadd.f32 %v258, 0.0
        %v267 = vadd.f32 %v259, 0.0
        %v268 = vld [vmem:[%s230 + $0x1] sm:$0xff]
        %v269 = vld [vmem:[%s230 + $0x11] sm:$0xff]
        %v270 = vld [vmem:[%s230 + $0x21] sm:$0xff]
        %v271 = vld [vmem:[%s230 + $0x31] sm:$0xff]
        %v272 = vld [vmem:[%s230 + $0x41] sm:$0xff]
        %v273 = vld [vmem:[%s230 + $0x51] sm:$0xff]
        %v274 = vld [vmem:[%s230 + $0x61] sm:$0xff]
        %v275 = vld [vmem:[%s230 + $0x71] sm:$0xff]
        %v276 = vld [vmem:[%s1 + $0x1] sm:$0x1]
        %v277 = vlaneseq
        %v278 = vshrl.u32 %v277, 7
        %v279 = vsub.s32 0, %v278
        %v280 = vrot.slane %v276, %v279
        %v281 = vmul.f32 %v268, %v280
        %v282 = vmul.f32 %v269, %v280
        %v283 = vmul.f32 %v270, %v280
        %v284 = vmul.f32 %v271, %v280
        %v285 = vmul.f32 %v272, %v280
        %v286 = vmul.f32 %v273, %v280
        %v287 = vmul.f32 %v274, %v280
        %v288 = vmul.f32 %v275, %v280
        %v289 = vadd.f32 %v260, %v281
        %v290 = vadd.f32 %v261, %v282
        %v291 = vadd.f32 %v262, %v283
        %v292 = vadd.f32 %v263, %v284
        %v293 = vadd.f32 %v264, %v285
        %v294 = vadd.f32 %v265, %v286
        %v295 = vadd.f32 %v266, %v287
        %v296 = vadd.f32 %v267, %v288
        %v297 = vld [vmem:[%s230 + $0x2] sm:$0xff]
        %v298 = vld [vmem:[%s230 + $0x12] sm:$0xff]
        %v299 = vld [vmem:[%s230 + $0x22] sm:$0xff]
        %v300 = vld [vmem:[%s230 + $0x32] sm:$0xff]
        %v301 = vld [vmem:[%s230 + $0x42] sm:$0xff]
        %v302 = vld [vmem:[%s230 + $0x52] sm:$0xff]
        %v303 = vld [vmem:[%s230 + $0x62] sm:$0xff]
        %v304 = vld [vmem:[%s230 + $0x72] sm:$0xff]
        %v305 = vld [vmem:[%s1 + $0x2] sm:$0x1]
        %v306 = vlaneseq
        %v307 = vshrl.u32 %v306, 7
        %v308 = vsub.s32 0, %v307
        %v309 = vrot.slane %v305, %v308
        %v310 = vmul.f32 %v297, %v309
        %v311 = vmul.f32 %v298, %v309
        %v312 = vmul.f32 %v299, %v309
        %v313 = vmul.f32 %v300, %v309
        %v314 = vmul.f32 %v301, %v309
        %v315 = vmul.f32 %v302, %v309
        %v316 = vmul.f32 %v303, %v309
        %v317 = vmul.f32 %v304, %v309
        %v318 = vadd.f32 %v289, %v310
        %v319 = vadd.f32 %v290, %v311
        %v320 = vadd.f32 %v291, %v312
        %v321 = vadd.f32 %v292, %v313
        %v322 = vadd.f32 %v293, %v314
        %v323 = vadd.f32 %v294, %v315
        %v324 = vadd.f32 %v295, %v316
        %v325 = vadd.f32 %v296, %v317
        %s326 = scalar_lea.vmem %s230, 16
        %v327 = vld [vmem:[%s326] sm:$0xff]
        %v328 = vld [vmem:[%s326 + $0x10] sm:$0xff]
        %v329 = vld [vmem:[%s326 + $0x20] sm:$0xff]
        %v330 = vld [vmem:[%s326 + $0x30] sm:$0xff]
        %v331 = vld [vmem:[%s326 + $0x40] sm:$0xff]
        %v332 = vld [vmem:[%s326 + $0x50] sm:$0xff]
        %v333 = vld [vmem:[%s326 + $0x60] sm:$0xff]
        %v334 = vld [vmem:[%s326 + $0x70] sm:$0xff]
        %v335 = vld [vmem:[%s1 + $0x3] sm:$0x1]
        %v336 = vlaneseq
        %v337 = vshrl.u32 %v336, 7
        %v338 = vsub.s32 0, %v337
        %v339 = vrot.slane %v335, %v338
        %v340 = vmul.f32 %v327, %v339
        %v341 = vmul.f32 %v328, %v339
        %v342 = vmul.f32 %v329, %v339
        %v343 = vmul.f32 %v330, %v339
        %v344 = vmul.f32 %v331, %v339
        %v345 = vmul.f32 %v332, %v339
        %v346 = vmul.f32 %v333, %v339
        %v347 = vmul.f32 %v334, %v339
        %v348 = vadd.f32 %v318, %v340
        %v349 = vadd.f32 %v319, %v341
        %v350 = vadd.f32 %v320, %v342
        %v351 = vadd.f32 %v321, %v343
        %v352 = vadd.f32 %v322, %v344
        %v353 = vadd.f32 %v323, %v345
        %v354 = vadd.f32 %v324, %v346
        %v355 = vadd.f32 %v325, %v347
        %v356 = vld [vmem:[%s326 + $0x1] sm:$0xff]
        %v357 = vld [vmem:[%s326 + $0x11] sm:$0xff]
        %v358 = vld [vmem:[%s326 + $0x21] sm:$0xff]
        %v359 = vld [vmem:[%s326 + $0x31] sm:$0xff]
        %v360 = vld [vmem:[%s326 + $0x41] sm:$0xff]
        %v361 = vld [vmem:[%s326 + $0x51] sm:$0xff]
        %v362 = vld [vmem:[%s326 + $0x61] sm:$0xff]
        %v363 = vld [vmem:[%s326 + $0x71] sm:$0xff]
        %v364 = vld [vmem:[%s1 + $0x4] sm:$0x1]
        %v365 = vlaneseq
        %v366 = vshrl.u32 %v365, 7
        %v367 = vsub.s32 0, %v366
        %v368 = vrot.slane %v364, %v367
        %v369 = vmul.f32 %v356, %v368
        %v370 = vmul.f32 %v357, %v368
        %v371 = vmul.f32 %v358, %v368
        %v372 = vmul.f32 %v359, %v368
        %v373 = vmul.f32 %v360, %v368
        %v374 = vmul.f32 %v361, %v368
        %v375 = vmul.f32 %v362, %v368
        %v376 = vmul.f32 %v363, %v368
        %v377 = vadd.f32 %v348, %v369
        %v378 = vadd.f32 %v349, %v370
        %v379 = vadd.f32 %v350, %v371
        %v380 = vadd.f32 %v351, %v372
        %v381 = vadd.f32 %v352, %v373
        %v382 = vadd.f32 %v353, %v374
        %v383 = vadd.f32 %v354, %v375
        %v384 = vadd.f32 %v355, %v376
        %v385 = vld [vmem:[%s326 + $0x2] sm:$0xff]
        %v386 = vld [vmem:[%s326 + $0x12] sm:$0xff]
        %v387 = vld [vmem:[%s326 + $0x22] sm:$0xff]
        %v388 = vld [vmem:[%s326 + $0x32] sm:$0xff]
        %v389 = vld [vmem:[%s326 + $0x42] sm:$0xff]
        %v390 = vld [vmem:[%s326 + $0x52] sm:$0xff]
        %v391 = vld [vmem:[%s326 + $0x62] sm:$0xff]
        %v392 = vld [vmem:[%s326 + $0x72] sm:$0xff]
        %v393 = vld [vmem:[%s1 + $0x5] sm:$0x1]
        %v394 = vlaneseq
        %v395 = vshrl.u32 %v394, 7
        %v396 = vsub.s32 0, %v395
        %v397 = vrot.slane %v393, %v396
        %v398 = vmul.f32 %v385, %v397
        %v399 = vmul.f32 %v386, %v397
        %v400 = vmul.f32 %v387, %v397
        %v401 = vmul.f32 %v388, %v397
        %v402 = vmul.f32 %v389, %v397
        %v403 = vmul.f32 %v390, %v397
        %v404 = vmul.f32 %v391, %v397
        %v405 = vmul.f32 %v392, %v397
        %v406 = vadd.f32 %v377, %v398
        %v407 = vadd.f32 %v378, %v399
        %v408 = vadd.f32 %v379, %v400
        %v409 = vadd.f32 %v380, %v401
        %v410 = vadd.f32 %v381, %v402
        %v411 = vadd.f32 %v382, %v403
        %v412 = vadd.f32 %v383, %v404
        %v413 = vadd.f32 %v384, %v405
        %s414 = scalar_lea.vmem %s230, 32
        %v415 = vld [vmem:[%s414] sm:$0xff]
        %v416 = vld [vmem:[%s414 + $0x10] sm:$0xff]
        %v417 = vld [vmem:[%s414 + $0x20] sm:$0xff]
        %v418 = vld [vmem:[%s414 + $0x30] sm:$0xff]
        %v419 = vld [vmem:[%s414 + $0x40] sm:$0xff]
        %v420 = vld [vmem:[%s414 + $0x50] sm:$0xff]
        %v421 = vld [vmem:[%s414 + $0x60] sm:$0xff]
        %v422 = vld [vmem:[%s414 + $0x70] sm:$0xff]
        %v423 = vld [vmem:[%s1 + $0x6] sm:$0x1]
        %v424 = vlaneseq
        %v425 = vshrl.u32 %v424, 7
        %v426 = vsub.s32 0, %v425
        %v427 = vrot.slane %v423, %v426
        %v428 = vmul.f32 %v415, %v427
        %v429 = vmul.f32 %v416, %v427
        %v430 = vmul.f32 %v417, %v427
        %v431 = vmul.f32 %v418, %v427
        %v432 = vmul.f32 %v419, %v427
        %v433 = vmul.f32 %v420, %v427
        %v434 = vmul.f32 %v421, %v427
        %v435 = vmul.f32 %v422, %v427
        %v436 = vadd.f32 %v406, %v428
        %v437 = vadd.f32 %v407, %v429
        %v438 = vadd.f32 %v408, %v430
        %v439 = vadd.f32 %v409, %v431
        %v440 = vadd.f32 %v410, %v432
        %v441 = vadd.f32 %v411, %v433
        %v442 = vadd.f32 %v412, %v434
        %v443 = vadd.f32 %v413, %v435
        %v444 = vld [vmem:[%s414 + $0x1] sm:$0xff]
        %v445 = vld [vmem:[%s414 + $0x11] sm:$0xff]
        %v446 = vld [vmem:[%s414 + $0x21] sm:$0xff]
        %v447 = vld [vmem:[%s414 + $0x31] sm:$0xff]
        %v448 = vld [vmem:[%s414 + $0x41] sm:$0xff]
        %v449 = vld [vmem:[%s414 + $0x51] sm:$0xff]
        %v450 = vld [vmem:[%s414 + $0x61] sm:$0xff]
        %v451 = vld [vmem:[%s414 + $0x71] sm:$0xff]
        %v452 = vld [vmem:[%s1 + $0x7] sm:$0x1]
        %v453 = vlaneseq
        %v454 = vshrl.u32 %v453, 7
        %v455 = vsub.s32 0, %v454
        %v456 = vrot.slane %v452, %v455
        %v457 = vmul.f32 %v444, %v456
        %v458 = vmul.f32 %v445, %v456
        %v459 = vmul.f32 %v446, %v456
        %v460 = vmul.f32 %v447, %v456
        %v461 = vmul.f32 %v448, %v456
        %v462 = vmul.f32 %v449, %v456
        %v463 = vmul.f32 %v450, %v456
        %v464 = vmul.f32 %v451, %v456
        %v465 = vadd.f32 %v436, %v457
        %v466 = vadd.f32 %v437, %v458
        %v467 = vadd.f32 %v438, %v459
        %v468 = vadd.f32 %v439, %v460
        %v469 = vadd.f32 %v440, %v461
        %v470 = vadd.f32 %v441, %v462
        %v471 = vadd.f32 %v442, %v463
        %v472 = vadd.f32 %v443, %v464
        %v473 = vld [vmem:[%s414 + $0x2] sm:$0xff]
        %v474 = vld [vmem:[%s414 + $0x12] sm:$0xff]
        %v475 = vld [vmem:[%s414 + $0x22] sm:$0xff]
        %v476 = vld [vmem:[%s414 + $0x32] sm:$0xff]
        %v477 = vld [vmem:[%s414 + $0x42] sm:$0xff]
        %v478 = vld [vmem:[%s414 + $0x52] sm:$0xff]
        %v479 = vld [vmem:[%s414 + $0x62] sm:$0xff]
        %v480 = vld [vmem:[%s414 + $0x72] sm:$0xff]
        %v481 = vld [vmem:[%s1 + $0x8] sm:$0x1]
        %v482 = vlaneseq
        %v483 = vshrl.u32 %v482, 7
        %v484 = vsub.s32 0, %v483
        %v485 = vrot.slane %v481, %v484
        %v486 = vmul.f32 %v473, %v485
        %v487 = vmul.f32 %v474, %v485
        %v488 = vmul.f32 %v475, %v485
        %v489 = vmul.f32 %v476, %v485
        %v490 = vmul.f32 %v477, %v485
        %v491 = vmul.f32 %v478, %v485
        %v492 = vmul.f32 %v479, %v485
        %v493 = vmul.f32 %v480, %v485
        %v494 = vadd.f32 %v465, %v486
        %v495 = vadd.f32 %v466, %v487
        %v496 = vadd.f32 %v467, %v488
        %v497 = vadd.f32 %v468, %v489
        %v498 = vadd.f32 %v469, %v490
        %v499 = vadd.f32 %v470, %v491
        %v500 = vadd.f32 %v471, %v492
        %v501 = vadd.f32 %v472, %v493
        %v502 = vpack.c.bf16 %v495, %v494
        %v503 = vpack.c.bf16 %v497, %v496
        %v504 = vpack.c.bf16 %v499, %v498
        %v505 = vpack.c.bf16 %v501, %v500
        %v506 = vld [vmem:[%s2] sm:$0xf]
        %v507 = vld [vmem:[%s2 + $0x4] sm:$0xf]
        %v508 = vld [vmem:[%s2 + $0x8] sm:$0xf]
        %v509 = vld [vmem:[%s2 + $0xc] sm:$0xf]
        %v510 = vld [vmem:[%s2 + $0x10] sm:$0xf]
        %v511 = vld [vmem:[%s2 + $0x14] sm:$0xf]
        %v512 = vld [vmem:[%s2 + $0x18] sm:$0xf]
        %v513 = vld [vmem:[%s2 + $0x1c] sm:$0xf]
        %v514 = vld [vmem:[%s2 + $0x20] sm:$0xf]
        %v515 = vld [vmem:[%s2 + $0x24] sm:$0xf]
        %v516 = vld [vmem:[%s2 + $0x28] sm:$0xf]
        %v517 = vld [vmem:[%s2 + $0x2c] sm:$0xf]
        %v518 = vld [vmem:[%s2 + $0x30] sm:$0xf]
        %v519 = vld [vmem:[%s2 + $0x34] sm:$0xf]
        %v520 = vld [vmem:[%s2 + $0x38] sm:$0xf]
        %v521 = vld [vmem:[%s2 + $0x3c] sm:$0xf]
        %v538 = vunpack.c.l.b16 %v506
        %v539 = vunpack.c.l.b16 %v507
        %v540 = vunpack.c.l.b16 %v508
        %v541 = vunpack.c.l.b16 %v509
        %v542 = vunpack.c.l.b16 %v510
        %v543 = vunpack.c.l.b16 %v511
        %v544 = vunpack.c.l.b16 %v512
        %v545 = vunpack.c.l.b16 %v513
        %v546 = vunpack.c.l.b16 %v514
        %v547 = vunpack.c.l.b16 %v515
        %v548 = vunpack.c.l.b16 %v516
        %v549 = vunpack.c.l.b16 %v517
        %v550 = vunpack.c.l.b16 %v518
        %v551 = vunpack.c.l.b16 %v519
        %v552 = vunpack.c.l.b16 %v520
        %v553 = vunpack.c.l.b16 %v521
        %v554 = vpack.c.b16 %v539, %v538
        %v555 = vpack.c.b16 %v541, %v540
        %v556 = vpack.c.b16 %v543, %v542
        %v557 = vpack.c.b16 %v545, %v544
        %v558 = vpack.c.b16 %v547, %v546
        %v559 = vpack.c.b16 %v549, %v548
        %v560 = vpack.c.b16 %v551, %v550
        %v561 = vpack.c.b16 %v553, %v552
        %570 = vmatprep.subr.bf16.mxu0 0
        %571 = vmatpush1.bf16.msra.mxu0 %v554
        %572 = vmatprep.subr.bf16.mxu0 0
        %573 = vmatpush1.bf16.msra.mxu0 %v555
        %574 = vmatprep.subr.bf16.mxu0 0
        %575 = vmatpush1.bf16.msra.mxu0 %v556
        %576 = vmatprep.subr.bf16.mxu0 0
        %577 = vmatpush1.bf16.msra.mxu0 %v557
        %578 = vmatprep.subr.bf16.mxu0 0
        %579 = vmatpush1.bf16.msra.mxu0 %v558
        %580 = vmatprep.subr.bf16.mxu0 0
        %581 = vmatpush1.bf16.msra.mxu0 %v559
        %582 = vmatprep.subr.bf16.mxu0 0
        %583 = vmatpush1.bf16.msra.mxu0 %v560
        %584 = vmatprep.subr.bf16.mxu0 0
        %585 = vmatpush1.bf16.msra.mxu0 %v561
        %586 = vmatprep.subr.bf16.mxu0 0
        %587 = vmatpush1.bf16.msra.mxu0 0
        %588 = vmatprep.subr.bf16.mxu0 0
        %589 = vmatpush1.bf16.msra.mxu0 0
        %590 = vmatprep.subr.bf16.mxu0 0
        %591 = vmatpush1.bf16.msra.mxu0 0
        %592 = vmatprep.subr.bf16.mxu0 0
        %593 = vmatpush1.bf16.msra.mxu0 0
        %594 = vmatprep.subr.bf16.mxu0 0
        %595 = vmatpush1.bf16.msra.mxu0 0
        %596 = vmatprep.subr.bf16.mxu0 0
        %597 = vmatpush1.bf16.msra.mxu0 0
        %598 = vmatprep.subr.bf16.mxu0 0
        %599 = vmatpush1.bf16.msra.mxu0 0
        %600 = vmatprep.subr.bf16.mxu0 0
        %601 = vmatpush1.bf16.msra.mxu0 0
        %602 = vmatprep.mubr.bf16.mxu0 0
        %603 = vmatmul.mubr.bf16.gmra.mrb[0].mxu0 %v502
        %v604 = vpop.f32.mrb[0].mxu0
        %v605 = vadd.f32 0.0, %v604
        %v606 = vpop.f32.mrb[0].mxu0
        %v607 = vpop.f32.mrb[0].mxu0
        %v608 = vadd.f32 0.0, %v607
        %v609 = vpop.f32.mrb[0].mxu0
        %610 = vmatprep.mubr.bf16.mxu0 0
        %611 = vmatmul.mubr.bf16.gmra.mrb[0].mxu0 %v503
        %v612 = vpop.f32.mrb[0].mxu0
        %v613 = vadd.f32 0.0, %v612
        %v614 = vpop.f32.mrb[0].mxu0
        %v615 = vpop.f32.mrb[0].mxu0
        %v616 = vadd.f32 0.0, %v615
        %v617 = vpop.f32.mrb[0].mxu0
        %618 = vmatprep.mubr.bf16.mxu0 0
        %619 = vmatmul.mubr.bf16.gmra.mrb[0].mxu0 %v504
        %v620 = vpop.f32.mrb[0].mxu0
        %v621 = vadd.f32 0.0, %v620
        %v622 = vpop.f32.mrb[0].mxu0
        %v623 = vpop.f32.mrb[0].mxu0
        %v624 = vadd.f32 0.0, %v623
        %v625 = vpop.f32.mrb[0].mxu0
        %626 = vmatprep.mubr.bf16.mxu0 0
        %627 = vmatmul.mubr.bf16.gmra.mrb[0].mxu0 %v505
        %v628 = vpop.f32.mrb[0].mxu0
        %v629 = vadd.f32 0.0, %v628
        %v630 = vpop.f32.mrb[0].mxu0
        %v631 = vpop.f32.mrb[0].mxu0
        %v632 = vadd.f32 0.0, %v631
        %v633 = vpop.f32.mrb[0].mxu0
        %634 = vdwg.mxu0
        %635 = vst [vmem:[%s218] sm:$0xff] %v605
        %636 = vst [vmem:[%s218 + $0x8] sm:$0xff] %v608
        %637 = vst [vmem:[%s218 + $0x10] sm:$0xff] %v613
        %638 = vst [vmem:[%s218 + $0x18] sm:$0xff] %v616
        %639 = vst [vmem:[%s218 + $0x20] sm:$0xff] %v621
        %640 = vst [vmem:[%s218 + $0x28] sm:$0xff] %v624
        %641 = vst [vmem:[%s218 + $0x30] sm:$0xff] %v629
        %642 = vst [vmem:[%s218 + $0x38] sm:$0xff] %v632
        %v643 = vlaneseq
        %v644 = vand.u32 %v643, 127
        %vm645 = vcmp.lt.s32.totalorder %v644, 8
        %v646 = vsel %vm645, %v605, -1e+30
        %v647 = vsel %vm645, %v608, -1e+30
        %v648 = vsel %vm645, %v613, -1e+30
        %v649 = vsel %vm645, %v616, -1e+30
        %v650 = vsel %vm645, %v621, -1e+30
        %v651 = vsel %vm645, %v624, -1e+30
        %v652 = vsel %vm645, %v629, -1e+30
        %v653 = vsel %vm645, %v632, -1e+30
        %654 = vmax.xlane.f32.xlu0 %v646
        %v655 = vpop.xlane.xlu0 %654
        %656 = vmax.xlane.f32.xlu0 %v647
        %v657 = vpop.xlane.xlu0 %656
        %658 = vmax.xlane.f32.xlu0 %v648
        %v659 = vpop.xlane.xlu0 %658
        %660 = vmax.xlane.f32.xlu0 %v649
        %v661 = vpop.xlane.xlu0 %660
        %662 = vmax.xlane.f32.xlu0 %v650
        %v663 = vpop.xlane.xlu0 %662
        %664 = vmax.xlane.f32.xlu0 %v651
        %v665 = vpop.xlane.xlu0 %664
        %666 = vmax.xlane.f32.xlu0 %v652
        %v667 = vpop.xlane.xlu0 %666
        %668 = vmax.xlane.f32.xlu0 %v653
        %v669 = vpop.xlane.xlu0 %668
        %v670 = vsub.f32 %v646, %v655
        %v671 = vsub.f32 %v647, %v657
        %v672 = vsub.f32 %v648, %v659
        %v673 = vsub.f32 %v649, %v661
        %v674 = vsub.f32 %v650, %v663
        %v675 = vsub.f32 %v651, %v665
        %v676 = vsub.f32 %v652, %v667
        %v677 = vsub.f32 %v653, %v669
        %v678 = vmul.f32 %v670, 1.442695
        %v679 = vpow.pop %v678
        %v680 = vmul.f32 %v671, 1.442695
        %v681 = vpow.pop %v680
        %v682 = vmul.f32 %v672, 1.442695
        %v683 = vpow.pop %v682
        %v684 = vmul.f32 %v673, 1.442695
        %v685 = vpow.pop %v684
        %v686 = vmul.f32 %v674, 1.442695
        %v687 = vpow.pop %v686
        %v688 = vmul.f32 %v675, 1.442695
        %v689 = vpow.pop %v688
        %v690 = vmul.f32 %v676, 1.442695
        %v691 = vpow.pop %v690
        %v692 = vmul.f32 %v677, 1.442695
        %v693 = vpow.pop %v692
        %694 = vadd.xlane.f32.xlu0 %v679
        %v695 = vpop.xlane.xlu0 %694
        %696 = vadd.xlane.f32.xlu0 %v681
        %v697 = vpop.xlane.xlu0 %696
        %698 = vadd.xlane.f32.xlu0 %v683
        %v699 = vpop.xlane.xlu0 %698
        %700 = vadd.xlane.f32.xlu0 %v685
        %v701 = vpop.xlane.xlu0 %700
        %702 = vadd.xlane.f32.xlu0 %v687
        %v703 = vpop.xlane.xlu0 %702
        %704 = vadd.xlane.f32.xlu0 %v689
        %v705 = vpop.xlane.xlu0 %704
        %706 = vadd.xlane.f32.xlu0 %v691
        %v707 = vpop.xlane.xlu0 %706
        %708 = vadd.xlane.f32.xlu0 %v693
        %v709 = vpop.xlane.xlu0 %708
        %v710 = vrcp.pop %v695
        %v711 = vrcp.pop %v697
        %v712 = vrcp.pop %v699
        %v713 = vrcp.pop %v701
        %v714 = vrcp.pop %v703
        %v715 = vrcp.pop %v705
        %v716 = vrcp.pop %v707
        %v717 = vrcp.pop %v709
        %v718 = vmul.f32 %v679, %v710
        %v719 = vmul.f32 %v681, %v711
        %v720 = vmul.f32 %v683, %v712
        %v721 = vmul.f32 %v685, %v713
        %v722 = vmul.f32 %v687, %v714
        %v723 = vmul.f32 %v689, %v715
        %v724 = vmul.f32 %v691, %v716
        %v725 = vmul.f32 %v693, %v717
        %v726 = vld [vmem:[%s3] sm:$0xff]
        %v727 = vld [vmem:[%s3 + $0x8] sm:$0xff]
        %vm728 = vcmask 523264
        %v730 = vsel %vm728, %v726, 0
        %v733 = vsel %vm728, %v727, 0
        %735 = vmatprep.subr.mxu0 0.0
        %736 = vmatpush1.msra.mxu0 %v718
        %737 = vmatprep.subr.mxu0 0.0
        %738 = vmatpush1.msra.mxu0 %v719
        %739 = vmatprep.subr.mxu0 0.0
        %740 = vmatpush1.msra.mxu0 %v720
        %741 = vmatprep.subr.mxu0 0.0
        %742 = vmatpush1.msra.mxu0 %v721
        %743 = vmatprep.subr.mxu0 0.0
        %744 = vmatpush1.msra.mxu0 %v722
        %745 = vmatprep.subr.mxu0 0.0
        %746 = vmatpush1.msra.mxu0 %v723
        %747 = vmatprep.subr.mxu0 0.0
        %748 = vmatpush1.msra.mxu0 %v724
        %749 = vmatprep.subr.mxu0 0.0
        %750 = vmatpush1.msra.mxu0 %v725
        %751 = vmatprep.subr.mxu0 0.0
        %752 = vmatpush1.msra.mxu0 0.0
        %753 = vmatprep.subr.mxu0 0.0
        %754 = vmatpush1.msra.mxu0 0.0
        %755 = vmatprep.subr.mxu0 0.0
        %756 = vmatpush1.msra.mxu0 0.0
        %757 = vmatprep.subr.mxu0 0.0
        %758 = vmatpush1.msra.mxu0 0.0
        %759 = vmatprep.subr.mxu0 0.0
        %760 = vmatpush1.msra.mxu0 0.0
        %761 = vmatprep.subr.mxu0 0.0
        %762 = vmatpush1.msra.mxu0 0.0
        %763 = vmatprep.subr.mxu0 0.0
        %764 = vmatpush1.msra.mxu0 0.0
        %765 = vmatprep.subr.mxu0 0.0
        %766 = vmatpush1.msra.mxu0 0.0
        %767 = vmatprep.subr.mxu0 0.0
        %768 = vmatpush1.msra.mxu0 0.0
        %769 = vmatprep.subr.mxu0 0.0
        %770 = vmatpush1.msra.mxu0 0.0
        %771 = vmatprep.subr.mxu0 0.0
        %772 = vmatpush1.msra.mxu0 0.0
        %773 = vmatprep.subr.mxu0 0.0
        %774 = vmatpush1.msra.mxu0 0.0
        %775 = vmatprep.subr.mxu0 0.0
        %776 = vmatpush1.msra.mxu0 0.0
        %777 = vmatprep.subr.mxu0 0.0
        %778 = vmatpush1.msra.mxu0 0.0
        %779 = vmatprep.subr.mxu0 0.0
        %780 = vmatpush1.msra.mxu0 0.0
        %781 = vmatprep.subr.mxu0 0.0
        %782 = vmatpush1.msra.mxu0 0.0
        %783 = vmatprep.subr.mxu0 0.0
        %784 = vmatpush1.msra.mxu0 0.0
        %785 = vmatprep.subr.mxu0 0.0
        %786 = vmatpush1.msra.mxu0 0.0
        %787 = vmatprep.subr.mxu0 0.0
        %788 = vmatpush1.msra.mxu0 0.0
        %789 = vmatprep.subr.mxu0 0.0
        %790 = vmatpush1.msra.mxu0 0.0
        %791 = vmatprep.subr.mxu0 0.0
        %792 = vmatpush1.msra.mxu0 0.0
        %793 = vmatprep.subr.mxu0 0.0
        %794 = vmatpush1.msra.mxu0 0.0
        %795 = vmatprep.subr.mxu0 0.0
        %796 = vmatpush1.msra.mxu0 0.0
        %797 = vmatprep.subr.mxu0 0.0
        %798 = vmatpush1.msra.mxu0 0.0
        %799 = vmatprep.mubr.f32.mxu0 0.0
        %800 = vmatmul.mubr.f32.gmra.mrb[0].mxu0 %v730
        %v801 = vpop.f32.mrb[0].mxu0
        %v802 = vadd.f32 0.0, %v801
        %v803 = vpop.f32.mrb[0].mxu0
        %804 = vmatprep.mubr.f32.mxu0 0.0
        %805 = vmatmul.mubr.f32.gmra.mrb[0].mxu0 %v733
        %v806 = vpop.f32.mrb[0].mxu0
        %v807 = vadd.f32 0.0, %v806
        %v808 = vpop.f32.mrb[0].mxu0
        %809 = vdwg.mxu0
        %810 = vst [vmem:[%s236] sm:$0xff] %v802
        %811 = vst [vmem:[%s236 + $0x8] sm:$0xff] %v807
        %s812 = sand.u32 %s117, 1
        %s813 = scalar_lea.sflag [#allocation3], %s812
        %s814 = sand.u32 %s117, 1
        %s815 = smul.addr %s814, 64
        %s816 = scalar_lea.vmem [#allocation2], %s815
        %s817 = smul.u32 2, %s20
        %p818 = scmp.lt.s32.totalorder %s817, 3
        %s819 = scalar_select %p818, %s817, 3
        %s820 = smul.addr %s819, 8
        %s821 = scalar_lea.vmem %s5, %s820
        // Predicated region
        $region37: #{twostage_part_model.4} parent=35 // pred_check
          %p822 = pneg %p127
        $region38: #{twostage_part_model.4} parent=35 // pred_check_branch
          %824 = sbr.rel (%p822) target = $region40
        $region39: #{twostage_part_model.4} parent=35 // pred_region
          %s825 = smul.u32 8, %s20
          %s827 = ssub.s32 1024, 1024
          %828 = vsyncadd %s813, %s827
          %s829 = smul.addr %s825, 128
          %s830 = scalar_lea.hbm %s4, %s829
          %s831 = sshll.u32 %s816, 4
          %s832 = int_to_ptr.vmem [resolvable:$true] %s831
          %837 = dma.vmem_to_hbm [thread:$0]  %s832, 1024, %s830, %s813, 128, 128, 8
        $region40: #{twostage_part_model.4} parent=35 // pred_fallthru
          _
        // Predicated region
        $region41: #{twostage_part_model.4} parent=35 // pred_check
          %p838 = pneg %p153
        $region42: #{twostage_part_model.4} parent=35 // pred_check_branch
          %840 = sbr.rel (%p838) target = $region44
        $region43: #{twostage_part_model.4} parent=35 // pred_region
          %s841 = smul.u32 2, %s20
        $region44: #{twostage_part_model.4} parent=35 // pred_fallthru
          _
      $region36: #{twostage_part_model.4} parent=5 // pred_fallthru
        _
      %p842 = scmp.le.s32.totalorder 2, %s15
      // Predicated region
      $region45: #{twostage_part_model.4} parent=5 // pred_check
        %p843 = pneg %p842
      $region46: #{twostage_part_model.4} parent=5 // pred_check_branch
        %845 = sbr.rel (%p843) target = $region48
      $region47: #{twostage_part_model.4} parent=5 // pred_region
        %s846 = ssub.s32 %s15, 2
        // Predicated region
        $region49: #{twostage_part_model.4} parent=47 // pred_check
          %p847 = pneg %p133
        $region50: #{twostage_part_model.4} parent=47 // pred_check_branch
          %849 = sbr.rel (%p847) target = $region52
        $region51: #{twostage_part_model.4} parent=47 // pred_region
          %s850 = sand.u32 %s118, 1
          %s851 = scalar_lea.sflag [#allocation3], %s850
          %s852 = sand.u32 %s118, 1
          %s853 = smul.addr %s852, 64
          %s854 = scalar_lea.vmem [#allocation2], %s853
          %855 = dma.done %s851, 1024
        $region52: #{twostage_part_model.4} parent=47 // pred_fallthru
          _
        // Predicated region
        $region53: #{twostage_part_model.4} parent=47 // pred_check
          %p856 = pneg %p159
        $region54: #{twostage_part_model.4} parent=47 // pred_check_branch
          %858 = sbr.rel (%p856) target = $region56
        $region55: #{twostage_part_model.4} parent=47 // pred_region
          %s859 = smul.u32 2, %s21
          %p860 = scmp.lt.s32.totalorder %s859, 3
          %s861 = scalar_select %p860, %s859, 3
          %s862 = smul.addr %s861, 8
          %s863 = scalar_lea.vmem %s5, %s862
        $region56: #{twostage_part_model.4} parent=47 // pred_fallthru
          _
      $region48: #{twostage_part_model.4} parent=5 // pred_fallthru
        _
    $region6: #{twostage_part_model.4} parent=1 // loop_footer
      %s19 = sadd.s32 1, %s15
    $region7: #{twostage_part_model.4} parent=1 // loop_footer_branch
      %14 = sbr.rel target = $region3
    $region8: #{twostage_part_model.4} parent=1 // loop_exit
      _
    %864 = vsyncpa [#allocation3], 1
    %s865 = scalar_lea.sflag [#allocation3], 1
    %866 = vsyncpa %s865, 1

</llo_original>
